<compile_context>
chip_gen: v7x
topology: tpu7x:2x2x1
jax: 0.10.0
libtpu: 0.0.40
codegen_flags: <defaults>
</compile_context>

<pallas_src>
import functools

import jax
import jax.numpy as jnp
from jax import lax
from jax.experimental import pallas as pl
from jax.experimental.pallas import tpu as pltpu


def _round_up(x, mult):
    return ((x + mult - 1) // mult) * mult


def _sigmoid(x):
    # Mathematically identical to sigmoid; tanh runs on the EUP (separate
    # VLIW slot), keeping the VALU free.
    return 0.5 * (jnp.tanh(0.5 * x) + 1.0)


def _fused_kernel(x_ref, mu_ref, pmat_ref, p_ref, theta_ref, *, m):
    # x_ref:    (tm, d)  input tile (any float dtype; up-converted)
    # mu_ref:   (1, d)   offset (broadcast over rows)
    # pmat_ref: (d, d)   precomputed U @ U.T (resident, constant)
    x = x_ref[...].astype(jnp.float32)
    mu = mu_ref[...]
    centered = m * (2.0 * x - 1.0) - mu                       # VPU elementwise
    theta_hat = mu + jnp.dot(centered, pmat_ref[...],
                             preferred_element_type=jnp.float32)  # one MXU pass
    theta_ref[...] = theta_hat.astype(theta_ref.dtype)
    p_ref[...] = _sigmoid(theta_hat).astype(p_ref.dtype)          # EUP


def _two_matmul_kernel(x_ref, mu_ref, u_ref, p_ref, theta_ref, *, m):
    # x_ref:  (tm, d)      input tile
    # mu_ref: (1, d)       offset
    # u_ref:  (d, k_pad)   loading matrix, k zero-padded to 128 (lane-dense)
    x = x_ref[...].astype(jnp.float32)
    mu = mu_ref[...]
    u = u_ref[...]
    centered = m * (2.0 * x - 1.0) - mu
    z = jnp.dot(centered, u, preferred_element_type=jnp.float32)     # (tm, k_pad)
    # Contract z's k-axis against U's k-axis -> (tm, d); no in-kernel transpose.
    theta_hat = mu + lax.dot_general(
        z, u, dimension_numbers=(((1,), (1,)), ((), ())),
        preferred_element_type=jnp.float32)
    theta_ref[...] = theta_hat.astype(theta_ref.dtype)
    p_ref[...] = _sigmoid(theta_hat).astype(p_ref.dtype)


def _vmem_limit_bytes():
    # Derive the scoped-VMEM limit from the chip (v5e/v6e: 128 MiB, v7x: 64 MiB
    # per TensorCore) with headroom, instead of relying on the 16/32 MiB default.
    try:
        cap = pltpu.get_tpu_info().vmem_capacity_bytes
    except Exception:
        cap = 64 * 1024 * 1024  # conservative: v7x per-TC size
    return int(cap * 0.85)


def logistic_pca_forward(x, mu, u, *, m=5.0, tm_max=2048, force_two_matmul=False):
    """Pallas implementation of LogisticPCA.forward.

    Args:
      x:  (N, d) float data (f32 or bf16 -- bf16 is exact for binary {0,1})
      mu: (d,)   float32 offset parameter
      u:  (d, k) float32 loading matrix
    Returns:
      (P_hat, theta_hat), each (N, d) float32.
    """
    n, d = x.shape
    k = u.shape[1]
    x_bytes = jnp.dtype(x.dtype).itemsize

    vmem_limit = _vmem_limit_bytes()
    budget = int(vmem_limit * 0.7)          # leave headroom for compiler scratch

    mu2 = mu.reshape(1, d).astype(jnp.float32)

    # ---- fused (U @ U.T) vs two-matmul path: roofline + VMEM gate ----------
    pmat_bytes = d * d * 4
    use_fused = ((not force_two_matmul)
                 and (d <= 512 or 2 * k >= d)          # extra FLOPs stay hidden
                 and (2 * pmat_bytes <= budget // 2))  # resident pmat must fit

    if use_fused:
        pmat = jnp.dot(u.astype(jnp.float32), u.astype(jnp.float32).T,
                       preferred_element_type=jnp.float32)
        kernel = functools.partial(_fused_kernel, m=float(m))
        param_arrays = (mu2, pmat)
        param_shapes = ((1, d), (d, d))
        resident_bytes = 2 * (pmat_bytes + d * 4)      # worst case: double-buffered
        flops = n * (2 * d * d + 5 * d)
        param_hbm = pmat_bytes + d * 4
    else:
        k_pad = max(128, _round_up(k, 128))            # lane-dense contraction depth
        u_p = u.astype(jnp.float32)
        if k_pad != k:
            u_p = jnp.zeros((d, k_pad), jnp.float32).at[:, :k].set(u_p)
        kernel = functools.partial(_two_matmul_kernel, m=float(m))
        param_arrays = (mu2, u_p)
        param_shapes = ((1, d), (d, k_pad))
        resident_bytes = 2 * (d * k_pad * 4 + d * 4)
        flops = n * (4 * d * k_pad + 5 * d)
        param_hbm = d * k_pad * 4 + d * 4

    # ---- row tile: biggest tile the honest VMEM budget allows --------------
    # Streams per row (double-buffered): x (x_bytes) + two f32 outputs.
    per_row_bytes = (x_bytes + 4 + 4) * d * 2
    tm = max(16, (budget - resident_bytes) // max(per_row_bytes, 1))
    tm = min(tm, tm_max)
    tm = min(tm, _round_up(n, 16))
    if n > 16:
        # Keep >= 2 grid steps so a "parallel" grid can feed both v7x cores.
        tm = min(tm, _round_up(pl.cdiv(n, 2), 16))
    tm = max(16, (tm // 16) * 16)                      # bf16-friendly sublane tiling

    grid = (pl.cdiv(n, tm),)                           # OOB rows of last block dropped
    x_spec = pl.BlockSpec((tm, d), lambda i: (i, 0))
    out_spec_p = pl.BlockSpec((tm, d), lambda i: (i, 0))
    out_spec_t = pl.BlockSpec((tm, d), lambda i: (i, 0))

    cost = pl.CostEstimate(
        flops=int(flops),
        transcendentals=int(n * d),
        bytes_accessed=int(n * d * (x_bytes + 8) + param_hbm),
    )

    def _run(single_buffer_params):
        if single_buffer_params:
            # Constant operands: single-buffer to reclaim VMEM for row tiles.
            param_specs = [
                pl.BlockSpec(shape, lambda i: (0, 0), pipeline_mode=pl.Buffered(1))
                for shape in param_shapes
            ]
        else:
            param_specs = [pl.BlockSpec(shape, lambda i: (0, 0))
                           for shape in param_shapes]
        return pl.pallas_call(
            kernel,
            out_shape=(
                jax.ShapeDtypeStruct((n, d), jnp.float32),
                jax.ShapeDtypeStruct((n, d), jnp.float32),
            ),
            grid_spec=pltpu.PrefetchScalarGridSpec(
                num_scalar_prefetch=0,
                grid=grid,
                in_specs=[x_spec] + param_specs,
                out_specs=[out_spec_p, out_spec_t],
            ),
            compiler_params=pltpu.CompilerParams(
                dimension_semantics=("parallel",),
                vmem_limit_bytes=vmem_limit),
            cost_estimate=cost,
        )(x, *param_arrays)

    try:
        p_hat, theta_hat = _run(True)
    except Exception:
        # Fallback for JAX versions where pipeline_mode / Buffered(1) on a
        # pallas_call BlockSpec is not supported.
        p_hat, theta_hat = _run(False)
    return p_hat, theta_hat


def _reference_forward(x, mu, u, m=5.0):
    theta_tilde = m * (2.0 * x - 1.0)
    z = (theta_tilde - mu) @ u
    theta_hat = mu + z @ u.T
    return jax.nn.sigmoid(theta_hat), theta_hat


if __name__ == "__main__":
    key = jax.random.PRNGKey(0)
    k_x, k_u = jax.random.split(key)

    # Small shapes consistent with the module: N samples of d binary features,
    # k principal components.  N is deliberately not a multiple of the row
    # tile to exercise the partial last grid block (no padding copies).
    N, d, k_comp = 200, 128, 16
    m = 5.0

    # Binary input data.
    x = (jax.random.uniform(k_x, (N, d)) > 0.5).astype(jnp.float32)

    # Parameter init matching __init__: mu = zeros(d), U = randn(d, k) * 0.01
    mu = jnp.zeros((d,), dtype=jnp.float32)
    u = jax.random.normal(k_u, (d, k_comp), dtype=jnp.float32) * 0.01

    p_ref, t_ref = _reference_forward(x, mu, u, m=m)

    # Fused (U @ U.T) path, f32 X streaming.
    p_hat, theta_hat = logistic_pca_forward(x, mu, u, m=m)
    jax.block_until_ready((p_hat, theta_hat))
    assert p_hat.shape == (N, d) and theta_hat.shape == (N, d)
    assert jnp.allclose(p_hat, p_ref, atol=1e-5, rtol=1e-5)
    assert jnp.allclose(theta_hat, t_ref, atol=1e-5, rtol=1e-5)

    # bf16 X streaming (exact for binary {0,1} data): less input HBM traffic.
    p_hat_b, theta_hat_b = logistic_pca_forward(x.astype(jnp.bfloat16), mu, u, m=m)
    jax.block_until_ready((p_hat_b, theta_hat_b))
    assert jnp.allclose(p_hat_b, p_ref, atol=1e-5, rtol=1e-5)
    assert jnp.allclose(theta_hat_b, t_ref, atol=1e-5, rtol=1e-5)

    # Two-matmul path (large-d / roofline fallback), exercised for coverage.
    p_hat2, theta_hat2 = logistic_pca_forward(x, mu, u, m=m,
                                              force_two_matmul=True)
    jax.block_until_ready((p_hat2, theta_hat2))
    assert jnp.allclose(p_hat2, p_ref, atol=1e-5, rtol=1e-5)
    assert jnp.allclose(theta_hat2, t_ref, atol=1e-5, rtol=1e-5)

    # TODO(synk): fit()/transform()/inverse_transform() (Adam + BCELoss training
    # loop) are host-side driver code, not part of the forward kernel.

    print("KERNEL_OK")
</pallas_src>

<mosaic_0001>
module attributes {stable_mosaic.version = 11 : i64} {
  func.func @_fused_kernel(%arg0: i32, %arg1: memref<112x128xf32, #tpu.memory_space<vmem>>, %arg2: memref<1x128xf32, #tpu.memory_space<vmem>>, %arg3: memref<128x128xf32, #tpu.memory_space<vmem>>, %arg4: memref<112x128xf32, #tpu.memory_space<vmem>>, %arg5: memref<112x128xf32, #tpu.memory_space<vmem>>) attributes {dimension_semantics = [#tpu.dimension_semantics<parallel>], iteration_bounds = array<i64: 2>, scalar_prefetch = 0 : i64, scratch_operands = 0 : i64, tpu.core_type = #tpu.core_type<tc>, window_params = [{transform_indices = @transform_0, window_bounds = array<i64: 112, 128>}, {pipeline_mode = #tpu.pipeline_mode<synchronous>, transform_indices = @transform_1, window_bounds = array<i64: 1, 128>}, {pipeline_mode = #tpu.pipeline_mode<synchronous>, transform_indices = @transform_2, window_bounds = array<i64: 128, 128>}, {transform_indices = @transform_3, window_bounds = array<i64: 112, 128>}, {transform_indices = @transform_4, window_bounds = array<i64: 112, 128>}]} {
    %c0 = arith.constant 0 : index
    %c0_0 = arith.constant 0 : index
    %0 = vector.load %arg1[%c0, %c0_0] : memref<112x128xf32, #tpu.memory_space<vmem>>, vector<112x128xf32>
    %c0_1 = arith.constant 0 : index
    %c0_2 = arith.constant 0 : index
    %1 = vector.load %arg2[%c0_1, %c0_2] : memref<1x128xf32, #tpu.memory_space<vmem>>, vector<1x128xf32>
    %cst = arith.constant 2.000000e+00 : f32
    %2 = vector.broadcast %cst : f32 to vector<112x128xf32>
    %3 = arith.mulf %2, %0 : vector<112x128xf32>
    %cst_3 = arith.constant 1.000000e+00 : f32
    %4 = vector.broadcast %cst_3 : f32 to vector<112x128xf32>
    %5 = arith.subf %3, %4 : vector<112x128xf32>
    %cst_4 = arith.constant 5.000000e+00 : f32
    %6 = vector.broadcast %cst_4 : f32 to vector<112x128xf32>
    %7 = arith.mulf %6, %5 : vector<112x128xf32>
    %8 = vector.broadcast %1 : vector<1x128xf32> to vector<112x128xf32>
    %9 = arith.subf %7, %8 : vector<112x128xf32>
    %c0_5 = arith.constant 0 : index
    %c0_6 = arith.constant 0 : index
    %10 = vector.load %arg3[%c0_5, %c0_6] : memref<128x128xf32, #tpu.memory_space<vmem>>, vector<128x128xf32>
    %cst_7 = arith.constant dense<0.000000e+00> : vector<112x128xf32>
    %11 = tpu.matmul %9, %10, %cst_7 {dimension_numbers = #tpu.dot_dimension_numbers<[1], [0], [0], [1], [0, 0, 1, 1], [], []>} : vector<112x128xf32>, vector<128x128xf32>, vector<112x128xf32> -> vector<112x128xf32>
    %12 = vector.broadcast %1 : vector<1x128xf32> to vector<112x128xf32>
    %13 = arith.addf %12, %11 : vector<112x128xf32>
    %c0_8 = arith.constant 0 : index
    %c0_9 = arith.constant 0 : index
    %14 = vector.load %arg5[%c0_8, %c0_9] : memref<112x128xf32, #tpu.memory_space<vmem>>, vector<112x128xf32>
    tpu.vector_store %arg5[%c0_8, %c0_9], %13 {strides = array<i32>} : memref<112x128xf32, #tpu.memory_space<vmem>>, vector<112x128xf32>,
    %cst_10 = arith.constant 5.000000e-01 : f32
    %15 = vector.broadcast %cst_10 : f32 to vector<112x128xf32>
    %16 = arith.mulf %15, %13 : vector<112x128xf32>
    %17 = math.tanh %16 : vector<112x128xf32>
    %cst_11 = arith.constant 1.000000e+00 : f32
    %18 = vector.broadcast %cst_11 : f32 to vector<112x128xf32>
    %19 = arith.addf %17, %18 : vector<112x128xf32>
    %cst_12 = arith.constant 5.000000e-01 : f32
    %20 = vector.broadcast %cst_12 : f32 to vector<112x128xf32>
    %21 = arith.mulf %20, %19 : vector<112x128xf32>
    %c0_13 = arith.constant 0 : index
    %c0_14 = arith.constant 0 : index
    %22 = vector.load %arg4[%c0_13, %c0_14] : memref<112x128xf32, #tpu.memory_space<vmem>>, vector<112x128xf32>
    tpu.vector_store %arg4[%c0_13, %c0_14], %21 {strides = array<i32>} : memref<112x128xf32, #tpu.memory_space<vmem>>, vector<112x128xf32>,
    return
  }
  func.func @transform_0(%arg0: i32) -> (i32, i32) {
    %c0_i32 = arith.constant 0 : i32
    %c0_i32_0 = arith.constant 0 : i32
    return %arg0, %c0_i32 : i32, i32
  }
  func.func @transform_1(%arg0: i32) -> (i32, i32) {
    %c0_i32 = arith.constant 0 : i32
    %c0_i32_0 = arith.constant 0 : i32
    %c0_i32_1 = arith.constant 0 : i32
    return %c0_i32, %c0_i32_0 : i32, i32
  }
  func.func @transform_2(%arg0: i32) -> (i32, i32) {
    %c0_i32 = arith.constant 0 : i32
    %c0_i32_0 = arith.constant 0 : i32
    %c0_i32_1 = arith.constant 0 : i32
    return %c0_i32, %c0_i32_0 : i32, i32
  }
  func.func @transform_3(%arg0: i32) -> (i32, i32) {
    %c0_i32 = arith.constant 0 : i32
    %c0_i32_0 = arith.constant 0 : i32
    return %arg0, %c0_i32 : i32, i32
  }
  func.func @transform_4(%arg0: i32) -> (i32, i32) {
    %c0_i32 = arith.constant 0 : i32
    %c0_i32_0 = arith.constant 0 : i32
    return %arg0, %c0_i32 : i32, i32
  }
}

module attributes {stable_mosaic.version = 11 : i64} {
  func.func @_fused_kernel(%arg0: i32, %arg1: memref<112x128xf32, #tpu.memory_space<vmem>>, %arg2: memref<1x128xf32, #tpu.memory_space<vmem>>, %arg3: memref<128x128xf32, #tpu.memory_space<vmem>>, %arg4: memref<112x128xf32, #tpu.memory_space<vmem>>, %arg5: memref<112x128xf32, #tpu.memory_space<vmem>>) attributes {dimension_semantics = [#tpu.dimension_semantics<parallel>], iteration_bounds = array<i64: 2>, scalar_prefetch = 0 : i64, scratch_operands = 0 : i64, tpu.core_type = #tpu.core_type<tc>, window_params = [{transform_indices = @transform_0, window_bounds = array<i64: 112, 128>}, {pipeline_mode = #tpu.pipeline_mode<synchronous>, transform_indices = @transform_1, window_bounds = array<i64: 1, 128>}, {pipeline_mode = #tpu.pipeline_mode<synchronous>, transform_indices = @transform_2, window_bounds = array<i64: 128, 128>}, {transform_indices = @transform_3, window_bounds = array<i64: 112, 128>}, {transform_indices = @transform_4, window_bounds = array<i64: 112, 128>}]} {
    %c0 = arith.constant 0 : index
    %c0_0 = arith.constant 0 : index
    %0 = vector.load %arg1[%c0, %c0_0] : memref<112x128xf32, #tpu.memory_space<vmem>>, vector<112x128xf32>
    %c0_1 = arith.constant 0 : index
    %c0_2 = arith.constant 0 : index
    %1 = vector.load %arg2[%c0_1, %c0_2] : memref<1x128xf32, #tpu.memory_space<vmem>>, vector<1x128xf32>
    %cst = arith.constant 2.000000e+00 : f32
    %2 = vector.broadcast %cst : f32 to vector<112x128xf32>
    %3 = arith.mulf %2, %0 : vector<112x128xf32>
    %cst_3 = arith.constant 1.000000e+00 : f32
    %4 = vector.broadcast %cst_3 : f32 to vector<112x128xf32>
    %5 = arith.subf %3, %4 : vector<112x128xf32>
    %cst_4 = arith.constant 5.000000e+00 : f32
    %6 = vector.broadcast %cst_4 : f32 to vector<112x128xf32>
    %7 = arith.mulf %6, %5 : vector<112x128xf32>
    %8 = vector.broadcast %1 : vector<1x128xf32> to vector<112x128xf32>
    %9 = arith.subf %7, %8 : vector<112x128xf32>
    %c0_5 = arith.constant 0 : index
    %c0_6 = arith.constant 0 : index
    %10 = vector.load %arg3[%c0_5, %c0_6] : memref<128x128xf32, #tpu.memory_space<vmem>>, vector<128x128xf32>
    %cst_7 = arith.constant dense<0.000000e+00> : vector<112x128xf32>
    %11 = tpu.matmul %9, %10, %cst_7 {dimension_numbers = #tpu.dot_dimension_numbers<[1], [0], [0], [1], [0, 0, 1, 1], [], []>} : vector<112x128xf32>, vector<128x128xf32>, vector<112x128xf32> -> vector<112x128xf32>
    %12 = vector.broadcast %1 : vector<1x128xf32> to vector<112x128xf32>
    %13 = arith.addf %12, %11 : vector<112x128xf32>
    %c0_8 = arith.constant 0 : index
    %c0_9 = arith.constant 0 : index
    %14 = vector.load %arg5[%c0_8, %c0_9] : memref<112x128xf32, #tpu.memory_space<vmem>>, vector<112x128xf32>
    tpu.vector_store %arg5[%c0_8, %c0_9], %13 {strides = array<i32>} : memref<112x128xf32, #tpu.memory_space<vmem>>, vector<112x128xf32>,
    %cst_10 = arith.constant 5.000000e-01 : f32
    %15 = vector.broadcast %cst_10 : f32 to vector<112x128xf32>
    %16 = arith.mulf %15, %13 : vector<112x128xf32>
    %17 = math.tanh %16 : vector<112x128xf32>
    %cst_11 = arith.constant 1.000000e+00 : f32
    %18 = vector.broadcast %cst_11 : f32 to vector<112x128xf32>
    %19 = arith.addf %17, %18 : vector<112x128xf32>
    %cst_12 = arith.constant 5.000000e-01 : f32
    %20 = vector.broadcast %cst_12 : f32 to vector<112x128xf32>
    %21 = arith.mulf %20, %19 : vector<112x128xf32>
    %c0_13 = arith.constant 0 : index
    %c0_14 = arith.constant 0 : index
    %22 = vector.load %arg4[%c0_13, %c0_14] : memref<112x128xf32, #tpu.memory_space<vmem>>, vector<112x128xf32>
    tpu.vector_store %arg4[%c0_13, %c0_14], %21 {strides = array<i32>} : memref<112x128xf32, #tpu.memory_space<vmem>>, vector<112x128xf32>,
    return
  }
  func.func @transform_0(%arg0: i32) -> (i32, i32) {
    %c0_i32 = arith.constant 0 : i32
    %c0_i32_0 = arith.constant 0 : i32
    return %arg0, %c0_i32 : i32, i32
  }
  func.func @transform_1(%arg0: i32) -> (i32, i32) {
    %c0_i32 = arith.constant 0 : i32
    %c0_i32_0 = arith.constant 0 : i32
    %c0_i32_1 = arith.constant 0 : i32
    return %c0_i32, %c0_i32_0 : i32, i32
  }
  func.func @transform_2(%arg0: i32) -> (i32, i32) {
    %c0_i32 = arith.constant 0 : i32
    %c0_i32_0 = arith.constant 0 : i32
    %c0_i32_1 = arith.constant 0 : i32
    return %c0_i32, %c0_i32_0 : i32, i32
  }
  func.func @transform_3(%arg0: i32) -> (i32, i32) {
    %c0_i32 = arith.constant 0 : i32
    %c0_i32_0 = arith.constant 0 : i32
    return %arg0, %c0_i32 : i32, i32
  }
  func.func @transform_4(%arg0: i32) -> (i32, i32) {
    %c0_i32 = arith.constant 0 : i32
    %c0_i32_0 = arith.constant 0 : i32
    return %arg0, %c0_i32 : i32, i32
  }
}

</mosaic_0001>

<llo_original>
// kernel: tpu_custom_call.1
$region0: #{tpu_custom_call.1}
  #allocation0 [shape = 'u32[]', space=smem, size = 0x4, offset = 0x4, fixed_abs, tag = 'smem constant byte address 0x4 - core index']
  #allocation1 [shape = 'u32[144,128]{1,0:T(1,128)}', space=vmem, size = 0x12000, scoped, tag = 'internal scratch']
  %s0 = inlined_call_operand.hbm [shape: f32[200,128], index: 0, kind: input, shape index: {}]
  %s1 = inlined_call_operand.vmem [shape: f32[1,128], index: 1, kind: input, shape index: {}]
  %s2 = inlined_call_operand.hbm [shape: f32[128,128], index: 2, kind: input, shape index: {}]
  %s3 = inlined_call_operand.hbm [shape: f32[200,128], index: 3, kind: output, shape index: {0}]
  %s4 = inlined_call_operand.hbm [shape: f32[200,128], index: 4, kind: output, shape index: {1}]
  %5 = xla_tuple %s3, %s4
  %s6 = sld [smem:[#allocation0]]
  $region61: #{tpu_custom_call.1} parent=0
    _
  %s8 = ssub.s32 1, %s6
  %s9 = scalar_select 0, %s8, %s6
  $region1: #{tpu_custom_call.1} parent=0
    #allocation2 [shape = 'u8[114688]{0}', space=vmem, size = 0x1c000, scoped, tag = 'input window, operand 0']
    #allocation3 [shape = 's32[2]{0}', space=sflag, size = 0x8, scoped, tag = 'scoped memory for tpu_custom_call.1']
    #allocation4 [shape = 's32[2]{0}', space=sflag, size = 0x8, scoped, tag = 'scoped memory for tpu_custom_call.1']
    #allocation5 [shape = 'u8[65536]{0}', space=vmem, size = 0x10000, scoped, tag = 'input window, operand 2, single buffered']
    #allocation6 [shape = 's32[1]{0}', space=sflag, size = 0x4, scoped, tag = 'scoped memory for tpu_custom_call.1']
    #allocation7 [shape = 'u8[114688]{0}', space=vmem, size = 0x1c000, scoped, tag = 'output window, operand 0']
    #allocation8 [shape = 'u8[114688]{0}', space=vmem, size = 0x1c000, scoped, tag = 'output window, operand 1']
    #allocation9 [shape = 's32[2]{0}', space=sflag, size = 0x8, scoped, tag = 'scoped memory for tpu_custom_call.1']
    %10 = vsyncpa [#allocation3], 0
    %s11 = scalar_lea.sflag [#allocation3], 1
    %12 = vsyncpa %s11, 0
    %13 = vsyncpa [#allocation6], 0
    %14 = vsyncpa [#allocation4], 0
    %s15 = scalar_lea.sflag [#allocation4], 1
    %16 = vsyncpa %s15, 0
    %17 = vsyncpa [#allocation9], 0
    %s18 = scalar_lea.sflag [#allocation9], 1
    %19 = vsyncpa %s18, 0
    loop: start=0, step=1, limit=4
    $region2: #{tpu_custom_call.1} parent=1 // loop_pre_header
      _
    $region3: #{tpu_custom_call.1} parent=1 // loop_header
      %s21 = sphi 0, %s25
      %p22 = scmp.ge.s32.totalorder %s21, 4
      %s31 = sphi 0, %s33
      %s34 = sphi 0, %s31
      %s35 = sphi 0, %s34
      %s51 = sphi 0, %s35
      %s55 = sphi 0, %s55
      %s57 = sphi 0, %s55
      %s58 = sphi 0, %s57
      %s72 = sphi 0, %s58
      %s76 = sphi 0, %s76
      %s78 = sphi 0, %s76
      %s79 = sphi 0, %s78
      %s93 = sphi 0, %s79
      %s99 = sphi 0, %s101
      %s102 = sphi 0, %s99
      %s103 = sphi 0, %s102
      %s119 = sphi 0, %s103
      %s125 = sphi 0, %s127
      %s128 = sphi 0, %s125
      %s129 = sphi 0, %s128
      %s145 = sphi 0, %s129
    $region4: #{tpu_custom_call.1} parent=1 // loop_header_branch
      %24 = sbr.rel (%p22) target = $region8
    $region5: #{tpu_custom_call.1} parent=1 // loop_body
      %s26 = ssub.s32 %s21, 1
      %s27 = ssub.s32 %s21, 2
      %s28 = sadd.s32 %s21, 1
      %s29 = ssub.s32 %s21, %s28
      %p30 = scmp.eq.s32.totalorder %s29, 0
      %s32 = sadd.s32 %s31, 1
      %s33 = scalar_select %p30, %s31, %s32
      %p36 = pneg %p30
      %p37 = scmp.eq.s32.totalorder %s21, 1
      %p38 = por %p36, %p37
      %p39 = scmp.ne.s32.totalorder %s31, %s34
      %p40 = scmp.eq.s32.totalorder %s21, 0
      %p41 = por %p39, %p40
      %p42 = scmp.ne.s32.totalorder %s31, %s34
      %p43 = scmp.eq.s32.totalorder %s26, 1
      %p44 = por %p42, %p43
      %p45 = scmp.ne.s32.totalorder %s34, %s35
      %p46 = scmp.eq.s32.totalorder %s26, 0
      %p47 = por %p45, %p46
      %p48 = scmp.ne.s32.totalorder %s34, %s35
      %p49 = scmp.eq.s32.totalorder %s27, 1
      %p50 = por %p48, %p49
      %p52 = scmp.ne.s32.totalorder %s35, %s51
      %p53 = scmp.eq.s32.totalorder %s27, 0
      %p54 = por %p52, %p53
      %s56 = sadd.s32 %s55, 1
      %p59 = scmp.eq.s32.totalorder %s21, 1
      %p60 = scmp.ne.s32.totalorder %s55, %s57
      %p61 = scmp.eq.s32.totalorder %s21, 0
      %p62 = por %p60, %p61
      %p63 = scmp.ne.s32.totalorder %s55, %s57
      %p64 = scmp.eq.s32.totalorder %s26, 1
      %p65 = por %p63, %p64
      %p66 = scmp.ne.s32.totalorder %s57, %s58
      %p67 = scmp.eq.s32.totalorder %s26, 0
      %p68 = por %p66, %p67
      %p69 = scmp.ne.s32.totalorder %s57, %s58
      %p70 = scmp.eq.s32.totalorder %s27, 1
      %p71 = por %p69, %p70
      %p73 = scmp.ne.s32.totalorder %s58, %s72
      %p74 = scmp.eq.s32.totalorder %s27, 0
      %p75 = por %p73, %p74
      %s77 = sadd.s32 %s76, 1
      %p80 = scmp.eq.s32.totalorder %s21, 1
      %p81 = scmp.ne.s32.totalorder %s76, %s78
      %p82 = scmp.eq.s32.totalorder %s21, 0
      %p83 = por %p81, %p82
      %p84 = scmp.ne.s32.totalorder %s76, %s78
      %p85 = scmp.eq.s32.totalorder %s26, 1
      %p86 = por %p84, %p85
      %p87 = scmp.ne.s32.totalorder %s78, %s79
      %p88 = scmp.eq.s32.totalorder %s26, 0
      %p89 = por %p87, %p88
      %p90 = scmp.ne.s32.totalorder %s78, %s79
      %p91 = scmp.eq.s32.totalorder %s27, 1
      %p92 = por %p90, %p91
      %p94 = scmp.ne.s32.totalorder %s79, %s93
      %p95 = scmp.eq.s32.totalorder %s27, 0
      %p96 = por %p94, %p95
      %s97 = ssub.s32 %s21, %s28
      %p98 = scmp.eq.s32.totalorder %s97, 0
      %s100 = sadd.s32 %s99, 1
      %s101 = scalar_select %p98, %s99, %s100
      %p104 = pneg %p98
      %p105 = scmp.eq.s32.totalorder %s21, 1
      %p106 = por %p104, %p105
      %p107 = scmp.ne.s32.totalorder %s99, %s102
      %p108 = scmp.eq.s32.totalorder %s21, 0
      %p109 = por %p107, %p108
      %p110 = scmp.ne.s32.totalorder %s99, %s102
      %p111 = scmp.eq.s32.totalorder %s26, 1
      %p112 = por %p110, %p111
      %p113 = scmp.ne.s32.totalorder %s102, %s103
      %p114 = scmp.eq.s32.totalorder %s26, 0
      %p115 = por %p113, %p114
      %p116 = scmp.ne.s32.totalorder %s102, %s103
      %p117 = scmp.eq.s32.totalorder %s27, 1
      %p118 = por %p116, %p117
      %p120 = scmp.ne.s32.totalorder %s103, %s119
      %p121 = scmp.eq.s32.totalorder %s27, 0
      %p122 = por %p120, %p121
      %s123 = ssub.s32 %s21, %s28
      %p124 = scmp.eq.s32.totalorder %s123, 0
      %s126 = sadd.s32 %s125, 1
      %s127 = scalar_select %p124, %s125, %s126
      %p130 = pneg %p124
      %p131 = scmp.eq.s32.totalorder %s21, 1
      %p132 = por %p130, %p131
      %p133 = scmp.ne.s32.totalorder %s125, %s128
      %p134 = scmp.eq.s32.totalorder %s21, 0
      %p135 = por %p133, %p134
      %p136 = scmp.ne.s32.totalorder %s125, %s128
      %p137 = scmp.eq.s32.totalorder %s26, 1
      %p138 = por %p136, %p137
      %p139 = scmp.ne.s32.totalorder %s128, %s129
      %p140 = scmp.eq.s32.totalorder %s26, 0
      %p141 = por %p139, %p140
      %p142 = scmp.ne.s32.totalorder %s128, %s129
      %p143 = scmp.eq.s32.totalorder %s27, 1
      %p144 = por %p142, %p143
      %p146 = scmp.ne.s32.totalorder %s129, %s145
      %p147 = scmp.eq.s32.totalorder %s27, 0
      %p148 = por %p146, %p147
      %p149 = scmp.le.s32.totalorder 1, %s21
      %p150 = scmp.lt.s32.totalorder %s21, 3
      %p151 = pnand %p149, %p150
      %p152 = pneg %p151
      // Predicated region
      $region9: #{tpu_custom_call.1} parent=5 // pred_check
        _
      $region10: #{tpu_custom_call.1} parent=5 // pred_check_branch
        %154 = sbr.rel (%p151) target = $region12
      $region11: #{tpu_custom_call.1} parent=5 // pred_region
        %s155 = ssub.s32 %s21, 1
        // Predicated region
        $region13: #{tpu_custom_call.1} parent=11 // pred_check
          %p156 = pneg %p68
        $region14: #{tpu_custom_call.1} parent=11 // pred_check_branch
          %158 = sbr.rel (%p156) target = $region16
        $region15: #{tpu_custom_call.1} parent=11 // pred_region
          _
        $region16: #{tpu_custom_call.1} parent=11 // pred_fallthru
          _
        // Predicated region
        $region17: #{tpu_custom_call.1} parent=11 // pred_check
          %p159 = pneg %p89
        $region18: #{tpu_custom_call.1} parent=11 // pred_check_branch
          %161 = sbr.rel (%p159) target = $region20
        $region19: #{tpu_custom_call.1} parent=11 // pred_region
          %s163 = ssub.s32 2048, 2048
          %164 = vsyncadd [#allocation6], %s163
          %s165 = sshll.u32 [#allocation5], 4
          %s166 = int_to_ptr.vmem [resolvable:$true] %s165
          %171 = dma.hbm_to_vmem [thread:$0]  %s2, 2048, %s166, [#allocation6], 128, 128, 8
        $region20: #{tpu_custom_call.1} parent=11 // pred_fallthru
          _
      $region12: #{tpu_custom_call.1} parent=5 // pred_fallthru
        _
      %p172 = scmp.lt.s32.totalorder %s21, 2
      // Predicated region
      $region21: #{tpu_custom_call.1} parent=5 // pred_check
        %p173 = pneg %p172
      $region22: #{tpu_custom_call.1} parent=5 // pred_check_branch
        %175 = sbr.rel (%p173) target = $region24
      $region23: #{tpu_custom_call.1} parent=5 // pred_region
        // Predicated region
        $region25: #{tpu_custom_call.1} parent=23 // pred_check
          %p176 = pneg %p41
        $region26: #{tpu_custom_call.1} parent=23 // pred_check_branch
          %178 = sbr.rel (%p176) target = $region28
        $region27: #{tpu_custom_call.1} parent=23 // pred_region
          %s179 = sand.u32 %s31, 1
          %s180 = scalar_lea.sflag [#allocation3], %s179
          %s181 = sand.u32 %s31, 1
          %s182 = smul.addr %s181, 112
          %s183 = scalar_lea.vmem [#allocation2], %s182
          %s184 = smul.u32 14, %s21
          %s185 = ssub.s32 25, %s184
          %p186 = scmp.lt.s32.totalorder %s185, 14
          %s187 = scalar_select %p186, %s185, 14
          %s188 = smul.u32 128, %s187
          %s190 = ssub.s32 1792, %s188
          %191 = vsyncadd %s180, %s190
          %p192 = scmp.ne.s32.totalorder 0, %s188
          %s193 = smul.addr %s184, 128
          %s194 = scalar_lea.hbm %s0, %s193
          %s195 = smul.u32 8, %s187
          %s196 = sshll.u32 %s183, 4
          %s197 = int_to_ptr.vmem [resolvable:$true] %s196
          %s198 = sshll.u32 %s195, 4
          %202 = dma.hbm_to_vmem [thread:$0]  (%p192), %s194, %s198, %s197, %s180, 128, 128, 8
        $region28: #{tpu_custom_call.1} parent=23 // pred_fallthru
          _
      $region24: #{tpu_custom_call.1} parent=5 // pred_fallthru
        _
      %p203 = scmp.le.s32.totalorder 1, %s21
      %p204 = scmp.lt.s32.totalorder %s21, 3
      %p205 = pnand %p203, %p204
      %p206 = pneg %p205
      // Predicated region
      $region29: #{tpu_custom_call.1} parent=5 // pred_check
        _
      $region30: #{tpu_custom_call.1} parent=5 // pred_check_branch
        %208 = sbr.rel (%p205) target = $region32
      $region31: #{tpu_custom_call.1} parent=5 // pred_region
        %s209 = ssub.s32 %s21, 1
        %s210 = sand.u32 %s34, 1
        %s211 = scalar_lea.sflag [#allocation3], %s210
        %s212 = sand.u32 %s34, 1
        %s213 = smul.addr %s212, 112
        %s214 = scalar_lea.vmem [#allocation2], %s213
        // Predicated region
        $region33: #{tpu_custom_call.1} parent=31 // pred_check
          %p215 = pneg %p47
        $region34: #{tpu_custom_call.1} parent=31 // pred_check_branch
          %217 = sbr.rel (%p215) target = $region36
        $region35: #{tpu_custom_call.1} parent=31 // pred_region
          %218 = dma.done %s211, 1792
        $region36: #{tpu_custom_call.1} parent=31 // pred_fallthru
          _
        // Predicated region
        $region37: #{tpu_custom_call.1} parent=31 // pred_check
          %p219 = pneg %p89
        $region38: #{tpu_custom_call.1} parent=31 // pred_check_branch
          %221 = sbr.rel (%p219) target = $region40
        $region39: #{tpu_custom_call.1} parent=31 // pred_region
          %222 = dma.done [#allocation6], 2048
        $region40: #{tpu_custom_call.1} parent=31 // pred_fallthru
          _
        %s223 = sand.u32 %s34, 1
        %s224 = scalar_lea.sflag [#allocation3], %s223
        %s225 = sand.u32 %s34, 1
        %s226 = smul.addr %s225, 112
        %s227 = scalar_lea.vmem [#allocation2], %s226
        %p228 = pneg %p47
        %p229 = pneg %p44
        %p230 = pneg %p68
        %p231 = pneg %p65
        %p232 = pneg %p89
        %p233 = pneg %p86
        %p234 = pneg %p115
        %p235 = pneg %p112
        %s236 = sand.u32 %s102, 1
        %s237 = scalar_lea.sflag [#allocation4], %s236
        %s238 = sand.u32 %s102, 1
        %s239 = smul.addr %s238, 112
        %s240 = scalar_lea.vmem [#allocation7], %s239
        %p241 = pneg %p141
        %p242 = pneg %p138
        %s243 = sand.u32 %s128, 1
        %s244 = scalar_lea.sflag [#allocation9], %s243
        %s245 = sand.u32 %s128, 1
        %s246 = smul.addr %s245, 112
        %s247 = scalar_lea.vmem [#allocation8], %s246
        %s248 = smul.u32 14, %s26
        %s249 = ssub.s32 25, %s248
        %p250 = scmp.lt.s32.totalorder %s249, 14
        %s251 = scalar_select %p250, %s249, 14
        %s252 = smul.u32 128, %s251
        %s253 = smul.u32 14, %s26
        %s254 = ssub.s32 25, %s253
        %p255 = scmp.lt.s32.totalorder %s254, 14
        %s256 = scalar_select %p255, %s254, 14
        %s257 = smul.u32 128, %s256
        %s258 = smul.u32 14, %s26
        %s259 = ssub.s32 25, %s258
        %p260 = scmp.lt.s32.totalorder %s259, 14
        %s261 = scalar_select %p260, %s259, 14
        %s262 = smul.u32 128, %s261
        %v263 = vld [vmem:[%s214] sm:$0xff]
        %v264 = vld [vmem:[%s214 + $0x8] sm:$0xff]
        %v265 = vld [vmem:[%s214 + $0x10] sm:$0xff]
        %v266 = vld [vmem:[%s214 + $0x18] sm:$0xff]
        %v267 = vld [vmem:[%s214 + $0x20] sm:$0xff]
        %v268 = vld [vmem:[%s214 + $0x28] sm:$0xff]
        %v269 = vld [vmem:[%s214 + $0x30] sm:$0xff]
        %v270 = vld [vmem:[%s214 + $0x38] sm:$0xff]
        %v271 = vld [vmem:[%s214 + $0x40] sm:$0xff]
        %v272 = vld [vmem:[%s214 + $0x48] sm:$0xff]
        %v273 = vld [vmem:[%s214 + $0x50] sm:$0xff]
        %v274 = vld [vmem:[%s214 + $0x58] sm:$0xff]
        %v275 = vld [vmem:[%s214 + $0x60] sm:$0xff]
        %v276 = vld [vmem:[%s214 + $0x68] sm:$0xff]
        %v277 = vld [vmem:[%s1] sm:$0x1]
        %v278 = vmul.f32 %v263, 2.0
        %v279 = vmul.f32 %v264, 2.0
        %v280 = vmul.f32 %v265, 2.0
        %v281 = vmul.f32 %v266, 2.0
        %v282 = vmul.f32 %v267, 2.0
        %v283 = vmul.f32 %v268, 2.0
        %v284 = vmul.f32 %v269, 2.0
        %v285 = vmul.f32 %v270, 2.0
        %v286 = vmul.f32 %v271, 2.0
        %v287 = vmul.f32 %v272, 2.0
        %v288 = vmul.f32 %v273, 2.0
        %v289 = vmul.f32 %v274, 2.0
        %v290 = vmul.f32 %v275, 2.0
        %v291 = vmul.f32 %v276, 2.0
        %v292 = vsub.f32 %v278, 1.0
        %v293 = vsub.f32 %v279, 1.0
        %v294 = vsub.f32 %v280, 1.0
        %v295 = vsub.f32 %v281, 1.0
        %v296 = vsub.f32 %v282, 1.0
        %v297 = vsub.f32 %v283, 1.0
        %v298 = vsub.f32 %v284, 1.0
        %v299 = vsub.f32 %v285, 1.0
        %v300 = vsub.f32 %v286, 1.0
        %v301 = vsub.f32 %v287, 1.0
        %v302 = vsub.f32 %v288, 1.0
        %v303 = vsub.f32 %v289, 1.0
        %v304 = vsub.f32 %v290, 1.0
        %v305 = vsub.f32 %v291, 1.0
        %v306 = vmul.f32 %v292, 5.0
        %v307 = vmul.f32 %v293, 5.0
        %v308 = vmul.f32 %v294, 5.0
        %v309 = vmul.f32 %v295, 5.0
        %v310 = vmul.f32 %v296, 5.0
        %v311 = vmul.f32 %v297, 5.0
        %v312 = vmul.f32 %v298, 5.0
        %v313 = vmul.f32 %v299, 5.0
        %v314 = vmul.f32 %v300, 5.0
        %v315 = vmul.f32 %v301, 5.0
        %v316 = vmul.f32 %v302, 5.0
        %v317 = vmul.f32 %v303, 5.0
        %v318 = vmul.f32 %v304, 5.0
        %v319 = vmul.f32 %v305, 5.0
        %v321 = vlaneseq
        %v322 = vshrl.u32 %v321, 7
        %v323 = vsub.s32 0, %v322
        %v324 = vrot.slane %v277, %v323
        %v326 = vsub.f32 %v306, %v324
        %v327 = vsub.f32 %v307, %v324
        %v328 = vsub.f32 %v308, %v324
        %v329 = vsub.f32 %v309, %v324
        %v330 = vsub.f32 %v310, %v324
        %v331 = vsub.f32 %v311, %v324
        %v332 = vsub.f32 %v312, %v324
        %v333 = vsub.f32 %v313, %v324
        %v334 = vsub.f32 %v314, %v324
        %v335 = vsub.f32 %v315, %v324
        %v336 = vsub.f32 %v316, %v324
        %v337 = vsub.f32 %v317, %v324
        %v338 = vsub.f32 %v318, %v324
        %v339 = vsub.f32 %v319, %v324
        %v340 = vld [vmem:[#allocation5] sm:$0xff]
        %v341 = vld [vmem:[#allocation5 + $0x8] sm:$0xff]
        %v342 = vld [vmem:[#allocation5 + $0x10] sm:$0xff]
        %v343 = vld [vmem:[#allocation5 + $0x18] sm:$0xff]
        %v344 = vld [vmem:[#allocation5 + $0x20] sm:$0xff]
        %v345 = vld [vmem:[#allocation5 + $0x28] sm:$0xff]
        %v346 = vld [vmem:[#allocation5 + $0x30] sm:$0xff]
        %v347 = vld [vmem:[#allocation5 + $0x38] sm:$0xff]
        %v348 = vld [vmem:[#allocation5 + $0x40] sm:$0xff]
        %v349 = vld [vmem:[#allocation5 + $0x48] sm:$0xff]
        %v350 = vld [vmem:[#allocation5 + $0x50] sm:$0xff]
        %v351 = vld [vmem:[#allocation5 + $0x58] sm:$0xff]
        %v352 = vld [vmem:[#allocation5 + $0x60] sm:$0xff]
        %v353 = vld [vmem:[#allocation5 + $0x68] sm:$0xff]
        %v354 = vld [vmem:[#allocation5 + $0x70] sm:$0xff]
        %v355 = vld [vmem:[#allocation5 + $0x78] sm:$0xff]
        %356 = vmatprep.subr.mxu0 0.0
        %357 = vmatpush1.msra.mxu0 %v340
        %358 = vmatprep.subr.mxu0 0.0
        %359 = vmatpush1.msra.mxu0 %v341
        %360 = vmatprep.subr.mxu0 0.0
        %361 = vmatpush1.msra.mxu0 %v342
        %362 = vmatprep.subr.mxu0 0.0
        %363 = vmatpush1.msra.mxu0 %v343
        %364 = vmatprep.subr.mxu0 0.0
        %365 = vmatpush1.msra.mxu0 %v344
        %366 = vmatprep.subr.mxu0 0.0
        %367 = vmatpush1.msra.mxu0 %v345
        %368 = vmatprep.subr.mxu0 0.0
        %369 = vmatpush1.msra.mxu0 %v346
        %370 = vmatprep.subr.mxu0 0.0
        %371 = vmatpush1.msra.mxu0 %v347
        %372 = vmatprep.subr.mxu0 0.0
        %373 = vmatpush1.msra.mxu0 %v348
        %374 = vmatprep.subr.mxu0 0.0
        %375 = vmatpush1.msra.mxu0 %v349
        %376 = vmatprep.subr.mxu0 0.0
        %377 = vmatpush1.msra.mxu0 %v350
        %378 = vmatprep.subr.mxu0 0.0
        %379 = vmatpush1.msra.mxu0 %v351
        %380 = vmatprep.subr.mxu0 0.0
        %381 = vmatpush1.msra.mxu0 %v352
        %382 = vmatprep.subr.mxu0 0.0
        %383 = vmatpush1.msra.mxu0 %v353
        %384 = vmatprep.subr.mxu0 0.0
        %385 = vmatpush1.msra.mxu0 %v354
        %386 = vmatprep.subr.mxu0 0.0
        %387 = vmatpush1.msra.mxu0 %v355
        %388 = vmatprep.subr.mxu0 0.0
        %389 = vmatpush1.msra.mxu0 0.0
        %390 = vmatprep.subr.mxu0 0.0
        %391 = vmatpush1.msra.mxu0 0.0
        %392 = vmatprep.subr.mxu0 0.0
        %393 = vmatpush1.msra.mxu0 0.0
        %394 = vmatprep.subr.mxu0 0.0
        %395 = vmatpush1.msra.mxu0 0.0
        %396 = vmatprep.subr.mxu0 0.0
        %397 = vmatpush1.msra.mxu0 0.0
        %398 = vmatprep.subr.mxu0 0.0
        %399 = vmatpush1.msra.mxu0 0.0
        %400 = vmatprep.subr.mxu0 0.0
        %401 = vmatpush1.msra.mxu0 0.0
        %402 = vmatprep.subr.mxu0 0.0
        %403 = vmatpush1.msra.mxu0 0.0
        %404 = vmatprep.subr.mxu0 0.0
        %405 = vmatpush1.msra.mxu0 0.0
        %406 = vmatprep.subr.mxu0 0.0
        %407 = vmatpush1.msra.mxu0 0.0
        %408 = vmatprep.subr.mxu0 0.0
        %409 = vmatpush1.msra.mxu0 0.0
        %410 = vmatprep.subr.mxu0 0.0
        %411 = vmatpush1.msra.mxu0 0.0
        %412 = vmatprep.subr.mxu0 0.0
        %413 = vmatpush1.msra.mxu0 0.0
        %414 = vmatprep.subr.mxu0 0.0
        %415 = vmatpush1.msra.mxu0 0.0
        %416 = vmatprep.subr.mxu0 0.0
        %417 = vmatpush1.msra.mxu0 0.0
        %418 = vmatprep.subr.mxu0 0.0
        %419 = vmatpush1.msra.mxu0 0.0
        %420 = vmatprep.mubr.f32.mxu0 0.0
        %421 = vmatmul.mubr.f32.gmra.mrb[0].mxu0 %v326
        %v422 = vpop.f32.mrb[0].mxu0
        %v423 = vadd.f32 0.0, %v422
        %v424 = vpop.f32.mrb[0].mxu0
        %425 = vmatprep.mubr.f32.mxu0 0.0
        %426 = vmatmul.mubr.f32.gmra.mrb[0].mxu0 %v327
        %v427 = vpop.f32.mrb[0].mxu0
        %v428 = vadd.f32 0.0, %v427
        %v429 = vpop.f32.mrb[0].mxu0
        %430 = vmatprep.mubr.f32.mxu0 0.0
        %431 = vmatmul.mubr.f32.gmra.mrb[0].mxu0 %v328
        %v432 = vpop.f32.mrb[0].mxu0
        %v433 = vadd.f32 0.0, %v432
        %v434 = vpop.f32.mrb[0].mxu0
        %435 = vmatprep.mubr.f32.mxu0 0.0
        %436 = vmatmul.mubr.f32.gmra.mrb[0].mxu0 %v329
        %v437 = vpop.f32.mrb[0].mxu0
        %v438 = vadd.f32 0.0, %v437
        %v439 = vpop.f32.mrb[0].mxu0
        %440 = vmatprep.mubr.f32.mxu0 0.0
        %441 = vmatmul.mubr.f32.gmra.mrb[0].mxu0 %v330
        %v442 = vpop.f32.mrb[0].mxu0
        %v443 = vadd.f32 0.0, %v442
        %v444 = vpop.f32.mrb[0].mxu0
        %445 = vmatprep.mubr.f32.mxu0 0.0
        %446 = vmatmul.mubr.f32.gmra.mrb[0].mxu0 %v331
        %v447 = vpop.f32.mrb[0].mxu0
        %v448 = vadd.f32 0.0, %v447
        %v449 = vpop.f32.mrb[0].mxu0
        %450 = vmatprep.mubr.f32.mxu0 0.0
        %451 = vmatmul.mubr.f32.gmra.mrb[0].mxu0 %v332
        %v452 = vpop.f32.mrb[0].mxu0
        %v453 = vadd.f32 0.0, %v452
        %v454 = vpop.f32.mrb[0].mxu0
        %455 = vmatprep.mubr.f32.mxu0 0.0
        %456 = vmatmul.mubr.f32.gmra.mrb[0].mxu0 %v333
        %v457 = vpop.f32.mrb[0].mxu0
        %v458 = vadd.f32 0.0, %v457
        %v459 = vpop.f32.mrb[0].mxu0
        %460 = vmatprep.mubr.f32.mxu0 0.0
        %461 = vmatmul.mubr.f32.gmra.mrb[0].mxu0 %v334
        %v462 = vpop.f32.mrb[0].mxu0
        %v463 = vadd.f32 0.0, %v462
        %v464 = vpop.f32.mrb[0].mxu0
        %465 = vmatprep.mubr.f32.mxu0 0.0
        %466 = vmatmul.mubr.f32.gmra.mrb[0].mxu0 %v335
        %v467 = vpop.f32.mrb[0].mxu0
        %v468 = vadd.f32 0.0, %v467
        %v469 = vpop.f32.mrb[0].mxu0
        %470 = vmatprep.mubr.f32.mxu0 0.0
        %471 = vmatmul.mubr.f32.gmra.mrb[0].mxu0 %v336
        %v472 = vpop.f32.mrb[0].mxu0
        %v473 = vadd.f32 0.0, %v472
        %v474 = vpop.f32.mrb[0].mxu0
        %475 = vmatprep.mubr.f32.mxu0 0.0
        %476 = vmatmul.mubr.f32.gmra.mrb[0].mxu0 %v337
        %v477 = vpop.f32.mrb[0].mxu0
        %v478 = vadd.f32 0.0, %v477
        %v479 = vpop.f32.mrb[0].mxu0
        %480 = vmatprep.mubr.f32.mxu0 0.0
        %481 = vmatmul.mubr.f32.gmra.mrb[0].mxu0 %v338
        %v482 = vpop.f32.mrb[0].mxu0
        %v483 = vadd.f32 0.0, %v482
        %v484 = vpop.f32.mrb[0].mxu0
        %485 = vmatprep.mubr.f32.mxu0 0.0
        %486 = vmatmul.mubr.f32.gmra.mrb[0].mxu0 %v339
        %v487 = vpop.f32.mrb[0].mxu0
        %v488 = vadd.f32 0.0, %v487
        %v489 = vpop.f32.mrb[0].mxu0
        %490 = vdwg.mxu0
        %v491 = vadd.f32 %v324, %v423
        %v492 = vadd.f32 %v324, %v428
        %v493 = vadd.f32 %v324, %v433
        %v494 = vadd.f32 %v324, %v438
        %v495 = vadd.f32 %v324, %v443
        %v496 = vadd.f32 %v324, %v448
        %v497 = vadd.f32 %v324, %v453
        %v498 = vadd.f32 %v324, %v458
        %v499 = vadd.f32 %v324, %v463
        %v500 = vadd.f32 %v324, %v468
        %v501 = vadd.f32 %v324, %v473
        %v502 = vadd.f32 %v324, %v478
        %v503 = vadd.f32 %v324, %v483
        %v504 = vadd.f32 %v324, %v488
        %505 = vst [vmem:[%s247] sm:$0xff] %v491
        %506 = vst [vmem:[%s247 + $0x8] sm:$0xff] %v492
        %507 = vst [vmem:[%s247 + $0x10] sm:$0xff] %v493
        %508 = vst [vmem:[%s247 + $0x18] sm:$0xff] %v494
        %509 = vst [vmem:[%s247 + $0x20] sm:$0xff] %v495
        %510 = vst [vmem:[%s247 + $0x28] sm:$0xff] %v496
        %511 = vst [vmem:[%s247 + $0x30] sm:$0xff] %v497
        %512 = vst [vmem:[%s247 + $0x38] sm:$0xff] %v498
        %513 = vst [vmem:[%s247 + $0x40] sm:$0xff] %v499
        %514 = vst [vmem:[%s247 + $0x48] sm:$0xff] %v500
        %515 = vst [vmem:[%s247 + $0x50] sm:$0xff] %v501
        %516 = vst [vmem:[%s247 + $0x58] sm:$0xff] %v502
        %517 = vst [vmem:[%s247 + $0x60] sm:$0xff] %v503
        %518 = vst [vmem:[%s247 + $0x68] sm:$0xff] %v504
        %v519 = vmul.f32 %v491, 0.5
        %v520 = vmul.f32 %v492, 0.5
        %v521 = vmul.f32 %v493, 0.5
        %v522 = vmul.f32 %v494, 0.5
        %v523 = vmul.f32 %v495, 0.5
        %v524 = vmul.f32 %v496, 0.5
        %v525 = vmul.f32 %v497, 0.5
        %v526 = vmul.f32 %v498, 0.5
        %v527 = vmul.f32 %v499, 0.5
        %v528 = vmul.f32 %v500, 0.5
        %v529 = vmul.f32 %v501, 0.5
        %v530 = vmul.f32 %v502, 0.5
        %v531 = vmul.f32 %v503, 0.5
        %v532 = vmul.f32 %v504, 0.5
        %v533 = vtanh.pop %v519
        %v534 = vtanh.pop %v520
        %v535 = vtanh.pop %v521
        %v536 = vtanh.pop %v522
        %v537 = vtanh.pop %v523
        %v538 = vtanh.pop %v524
        %v539 = vtanh.pop %v525
        %v540 = vtanh.pop %v526
        %v541 = vtanh.pop %v527
        %v542 = vtanh.pop %v528
        %v543 = vtanh.pop %v529
        %v544 = vtanh.pop %v530
        %v545 = vtanh.pop %v531
        %v546 = vtanh.pop %v532
        %v547 = vadd.f32 %v533, 1.0
        %v548 = vadd.f32 %v534, 1.0
        %v549 = vadd.f32 %v535, 1.0
        %v550 = vadd.f32 %v536, 1.0
        %v551 = vadd.f32 %v537, 1.0
        %v552 = vadd.f32 %v538, 1.0
        %v553 = vadd.f32 %v539, 1.0
        %v554 = vadd.f32 %v540, 1.0
        %v555 = vadd.f32 %v541, 1.0
        %v556 = vadd.f32 %v542, 1.0
        %v557 = vadd.f32 %v543, 1.0
        %v558 = vadd.f32 %v544, 1.0
        %v559 = vadd.f32 %v545, 1.0
        %v560 = vadd.f32 %v546, 1.0
        %v561 = vmul.f32 %v547, 0.5
        %v562 = vmul.f32 %v548, 0.5
        %v563 = vmul.f32 %v549, 0.5
        %v564 = vmul.f32 %v550, 0.5
        %v565 = vmul.f32 %v551, 0.5
        %v566 = vmul.f32 %v552, 0.5
        %v567 = vmul.f32 %v553, 0.5
        %v568 = vmul.f32 %v554, 0.5
        %v569 = vmul.f32 %v555, 0.5
        %v570 = vmul.f32 %v556, 0.5
        %v571 = vmul.f32 %v557, 0.5
        %v572 = vmul.f32 %v558, 0.5
        %v573 = vmul.f32 %v559, 0.5
        %v574 = vmul.f32 %v560, 0.5
        %575 = vst [vmem:[%s240] sm:$0xff] %v561
        %576 = vst [vmem:[%s240 + $0x8] sm:$0xff] %v562
        %577 = vst [vmem:[%s240 + $0x10] sm:$0xff] %v563
        %578 = vst [vmem:[%s240 + $0x18] sm:$0xff] %v564
        %579 = vst [vmem:[%s240 + $0x20] sm:$0xff] %v565
        %580 = vst [vmem:[%s240 + $0x28] sm:$0xff] %v566
        %581 = vst [vmem:[%s240 + $0x30] sm:$0xff] %v567
        %582 = vst [vmem:[%s240 + $0x38] sm:$0xff] %v568
        %583 = vst [vmem:[%s240 + $0x40] sm:$0xff] %v569
        %584 = vst [vmem:[%s240 + $0x48] sm:$0xff] %v570
        %585 = vst [vmem:[%s240 + $0x50] sm:$0xff] %v571
        %586 = vst [vmem:[%s240 + $0x58] sm:$0xff] %v572
        %587 = vst [vmem:[%s240 + $0x60] sm:$0xff] %v573
        %588 = vst [vmem:[%s240 + $0x68] sm:$0xff] %v574
        %s589 = sand.u32 %s102, 1
        %s590 = scalar_lea.sflag [#allocation4], %s589
        %s591 = sand.u32 %s102, 1
        %s592 = smul.addr %s591, 112
        %s593 = scalar_lea.vmem [#allocation7], %s592
        %s594 = sand.u32 %s128, 1
        %s595 = scalar_lea.sflag [#allocation9], %s594
        %s596 = sand.u32 %s128, 1
        %s597 = smul.addr %s596, 112
        %s598 = scalar_lea.vmem [#allocation8], %s597
        // Predicated region
        $region41: #{tpu_custom_call.1} parent=31 // pred_check
          %p599 = pneg %p112
        $region42: #{tpu_custom_call.1} parent=31 // pred_check_branch
          %601 = sbr.rel (%p599) target = $region44
        $region43: #{tpu_custom_call.1} parent=31 // pred_region
          %s602 = smul.u32 14, %s26
          %s603 = ssub.s32 25, %s602
          %p604 = scmp.lt.s32.totalorder %s603, 14
          %s605 = scalar_select %p604, %s603, 14
          %s606 = smul.u32 128, %s605
          %s608 = ssub.s32 1792, %s606
          %609 = vsyncadd %s590, %s608
          %p610 = scmp.ne.s32.totalorder 0, %s606
          %s611 = smul.addr %s602, 128
          %s612 = scalar_lea.hbm %s3, %s611
          %s613 = smul.u32 8, %s605
          %s614 = sshll.u32 %s593, 4
          %s615 = int_to_ptr.vmem [resolvable:$true] %s614
          %s616 = sshll.u32 %s613, 4
          %620 = dma.vmem_to_hbm [thread:$0]  (%p610), %s615, %s616, %s612, %s590, 128, 128, 8
        $region44: #{tpu_custom_call.1} parent=31 // pred_fallthru
          _
        // Predicated region
        $region45: #{tpu_custom_call.1} parent=31 // pred_check
          %p621 = pneg %p138
        $region46: #{tpu_custom_call.1} parent=31 // pred_check_branch
          %623 = sbr.rel (%p621) target = $region48
        $region47: #{tpu_custom_call.1} parent=31 // pred_region
          %s624 = smul.u32 14, %s26
          %s625 = ssub.s32 25, %s624
          %p626 = scmp.lt.s32.totalorder %s625, 14
          %s627 = scalar_select %p626, %s625, 14
          %s628 = smul.u32 128, %s627
          %s630 = ssub.s32 1792, %s628
          %631 = vsyncadd %s595, %s630
          %p632 = scmp.ne.s32.totalorder 0, %s628
          %s633 = smul.addr %s624, 128
          %s634 = scalar_lea.hbm %s4, %s633
          %s635 = smul.u32 8, %s627
          %s636 = sshll.u32 %s598, 4
          %s637 = int_to_ptr.vmem [resolvable:$true] %s636
          %s638 = sshll.u32 %s635, 4
          %642 = dma.vmem_to_hbm [thread:$0]  (%p632), %s637, %s638, %s634, %s595, 128, 128, 8
        $region48: #{tpu_custom_call.1} parent=31 // pred_fallthru
          _
      $region32: #{tpu_custom_call.1} parent=5 // pred_fallthru
        _
      %p643 = scmp.le.s32.totalorder 2, %s21
      // Predicated region
      $region49: #{tpu_custom_call.1} parent=5 // pred_check
        %p644 = pneg %p643
      $region50: #{tpu_custom_call.1} parent=5 // pred_check_branch
        %646 = sbr.rel (%p644) target = $region52
      $region51: #{tpu_custom_call.1} parent=5 // pred_region
        %s647 = ssub.s32 %s21, 2
        // Predicated region
        $region53: #{tpu_custom_call.1} parent=51 // pred_check
          %p648 = pneg %p118
        $region54: #{tpu_custom_call.1} parent=51 // pred_check_branch
          %650 = sbr.rel (%p648) target = $region56
        $region55: #{tpu_custom_call.1} parent=51 // pred_region
          %s651 = sand.u32 %s103, 1
          %s652 = scalar_lea.sflag [#allocation4], %s651
          %s653 = sand.u32 %s103, 1
          %s654 = smul.addr %s653, 112
          %s655 = scalar_lea.vmem [#allocation7], %s654
          %656 = dma.done %s652, 1792
        $region56: #{tpu_custom_call.1} parent=51 // pred_fallthru
          _
        // Predicated region
        $region57: #{tpu_custom_call.1} parent=51 // pred_check
          %p657 = pneg %p144
        $region58: #{tpu_custom_call.1} parent=51 // pred_check_branch
          %659 = sbr.rel (%p657) target = $region60
        $region59: #{tpu_custom_call.1} parent=51 // pred_region
          %s660 = sand.u32 %s129, 1
          %s661 = scalar_lea.sflag [#allocation9], %s660
          %s662 = sand.u32 %s129, 1
          %s663 = smul.addr %s662, 112
          %s664 = scalar_lea.vmem [#allocation8], %s663
          %665 = dma.done %s661, 1792
        $region60: #{tpu_custom_call.1} parent=51 // pred_fallthru
          _
      $region52: #{tpu_custom_call.1} parent=5 // pred_fallthru
        _
    $region6: #{tpu_custom_call.1} parent=1 // loop_footer
      %s25 = sadd.s32 1, %s21
    $region7: #{tpu_custom_call.1} parent=1 // loop_footer_branch
      %20 = sbr.rel target = $region3
    $region8: #{tpu_custom_call.1} parent=1 // loop_exit
      _
    %666 = vsyncpa [#allocation3], 1
    %s667 = scalar_lea.sflag [#allocation3], 1
    %668 = vsyncpa %s667, 1
    %669 = vsyncpa [#allocation6], 1
    %670 = vsyncpa [#allocation4], 1
    %s671 = scalar_lea.sflag [#allocation4], 1
    %672 = vsyncpa %s671, 1
    %673 = vsyncpa [#allocation9], 1
    %s674 = scalar_lea.sflag [#allocation9], 1
    %675 = vsyncpa %s674, 1

// kernel: tpu_custom_call.1
$region0: #{tpu_custom_call.1}
  #allocation0 [shape = 'u32[]', space=smem, size = 0x4, offset = 0x4, fixed_abs, tag = 'smem constant byte address 0x4 - core index']
  #allocation1 [shape = 'u32[144,128]{1,0:T(1,128)}', space=vmem, size = 0x12000, scoped, tag = 'internal scratch']
  %s0 = inlined_call_operand.hbm [shape: f32[200,128], index: 0, kind: input, shape index: {}]
  %s1 = inlined_call_operand.vmem [shape: f32[1,128], index: 1, kind: input, shape index: {}]
  %s2 = inlined_call_operand.hbm [shape: f32[128,128], index: 2, kind: input, shape index: {}]
  %s3 = inlined_call_operand.hbm [shape: f32[200,128], index: 3, kind: output, shape index: {0}]
  %s4 = inlined_call_operand.hbm [shape: f32[200,128], index: 4, kind: output, shape index: {1}]
  %5 = xla_tuple %s3, %s4
  %s6 = sld [smem:[#allocation0]]
  $region61: #{tpu_custom_call.1} parent=0
    _
  %s8 = ssub.s32 1, %s6
  %s9 = scalar_select 0, %s8, %s6
  $region1: #{tpu_custom_call.1} parent=0
    #allocation2 [shape = 'u8[114688]{0}', space=vmem, size = 0x1c000, scoped, tag = 'input window, operand 0']
    #allocation3 [shape = 's32[2]{0}', space=sflag, size = 0x8, scoped, tag = 'scoped memory for tpu_custom_call.1']
    #allocation4 [shape = 's32[2]{0}', space=sflag, size = 0x8, scoped, tag = 'scoped memory for tpu_custom_call.1']
    #allocation5 [shape = 'u8[65536]{0}', space=vmem, size = 0x10000, scoped, tag = 'input window, operand 2, single buffered']
    #allocation6 [shape = 's32[1]{0}', space=sflag, size = 0x4, scoped, tag = 'scoped memory for tpu_custom_call.1']
    #allocation7 [shape = 'u8[114688]{0}', space=vmem, size = 0x1c000, scoped, tag = 'output window, operand 0']
    #allocation8 [shape = 'u8[114688]{0}', space=vmem, size = 0x1c000, scoped, tag = 'output window, operand 1']
    #allocation9 [shape = 's32[2]{0}', space=sflag, size = 0x8, scoped, tag = 'scoped memory for tpu_custom_call.1']
    %10 = vsyncpa [#allocation3], 0
    %s11 = scalar_lea.sflag [#allocation3], 1
    %12 = vsyncpa %s11, 0
    %13 = vsyncpa [#allocation6], 0
    %14 = vsyncpa [#allocation4], 0
    %s15 = scalar_lea.sflag [#allocation4], 1
    %16 = vsyncpa %s15, 0
    %17 = vsyncpa [#allocation9], 0
    %s18 = scalar_lea.sflag [#allocation9], 1
    %19 = vsyncpa %s18, 0
    loop: start=0, step=1, limit=4
    $region2: #{tpu_custom_call.1} parent=1 // loop_pre_header
      _
    $region3: #{tpu_custom_call.1} parent=1 // loop_header
      %s21 = sphi 0, %s25
      %p22 = scmp.ge.s32.totalorder %s21, 4
      %s31 = sphi 0, %s33
      %s34 = sphi 0, %s31
      %s35 = sphi 0, %s34
      %s51 = sphi 0, %s35
      %s55 = sphi 0, %s55
      %s57 = sphi 0, %s55
      %s58 = sphi 0, %s57
      %s72 = sphi 0, %s58
      %s76 = sphi 0, %s76
      %s78 = sphi 0, %s76
      %s79 = sphi 0, %s78
      %s93 = sphi 0, %s79
      %s99 = sphi 0, %s101
      %s102 = sphi 0, %s99
      %s103 = sphi 0, %s102
      %s119 = sphi 0, %s103
      %s125 = sphi 0, %s127
      %s128 = sphi 0, %s125
      %s129 = sphi 0, %s128
      %s145 = sphi 0, %s129
    $region4: #{tpu_custom_call.1} parent=1 // loop_header_branch
      %24 = sbr.rel (%p22) target = $region8
    $region5: #{tpu_custom_call.1} parent=1 // loop_body
      %s26 = ssub.s32 %s21, 1
      %s27 = ssub.s32 %s21, 2
      %s28 = sadd.s32 %s21, 1
      %s29 = ssub.s32 %s21, %s28
      %p30 = scmp.eq.s32.totalorder %s29, 0
      %s32 = sadd.s32 %s31, 1
      %s33 = scalar_select %p30, %s31, %s32
      %p36 = pneg %p30
      %p37 = scmp.eq.s32.totalorder %s21, 1
      %p38 = por %p36, %p37
      %p39 = scmp.ne.s32.totalorder %s31, %s34
      %p40 = scmp.eq.s32.totalorder %s21, 0
      %p41 = por %p39, %p40
      %p42 = scmp.ne.s32.totalorder %s31, %s34
      %p43 = scmp.eq.s32.totalorder %s26, 1
      %p44 = por %p42, %p43
      %p45 = scmp.ne.s32.totalorder %s34, %s35
      %p46 = scmp.eq.s32.totalorder %s26, 0
      %p47 = por %p45, %p46
      %p48 = scmp.ne.s32.totalorder %s34, %s35
      %p49 = scmp.eq.s32.totalorder %s27, 1
      %p50 = por %p48, %p49
      %p52 = scmp.ne.s32.totalorder %s35, %s51
      %p53 = scmp.eq.s32.totalorder %s27, 0
      %p54 = por %p52, %p53
      %s56 = sadd.s32 %s55, 1
      %p59 = scmp.eq.s32.totalorder %s21, 1
      %p60 = scmp.ne.s32.totalorder %s55, %s57
      %p61 = scmp.eq.s32.totalorder %s21, 0
      %p62 = por %p60, %p61
      %p63 = scmp.ne.s32.totalorder %s55, %s57
      %p64 = scmp.eq.s32.totalorder %s26, 1
      %p65 = por %p63, %p64
      %p66 = scmp.ne.s32.totalorder %s57, %s58
      %p67 = scmp.eq.s32.totalorder %s26, 0
      %p68 = por %p66, %p67
      %p69 = scmp.ne.s32.totalorder %s57, %s58
      %p70 = scmp.eq.s32.totalorder %s27, 1
      %p71 = por %p69, %p70
      %p73 = scmp.ne.s32.totalorder %s58, %s72
      %p74 = scmp.eq.s32.totalorder %s27, 0
      %p75 = por %p73, %p74
      %s77 = sadd.s32 %s76, 1
      %p80 = scmp.eq.s32.totalorder %s21, 1
      %p81 = scmp.ne.s32.totalorder %s76, %s78
      %p82 = scmp.eq.s32.totalorder %s21, 0
      %p83 = por %p81, %p82
      %p84 = scmp.ne.s32.totalorder %s76, %s78
      %p85 = scmp.eq.s32.totalorder %s26, 1
      %p86 = por %p84, %p85
      %p87 = scmp.ne.s32.totalorder %s78, %s79
      %p88 = scmp.eq.s32.totalorder %s26, 0
      %p89 = por %p87, %p88
      %p90 = scmp.ne.s32.totalorder %s78, %s79
      %p91 = scmp.eq.s32.totalorder %s27, 1
      %p92 = por %p90, %p91
      %p94 = scmp.ne.s32.totalorder %s79, %s93
      %p95 = scmp.eq.s32.totalorder %s27, 0
      %p96 = por %p94, %p95
      %s97 = ssub.s32 %s21, %s28
      %p98 = scmp.eq.s32.totalorder %s97, 0
      %s100 = sadd.s32 %s99, 1
      %s101 = scalar_select %p98, %s99, %s100
      %p104 = pneg %p98
      %p105 = scmp.eq.s32.totalorder %s21, 1
      %p106 = por %p104, %p105
      %p107 = scmp.ne.s32.totalorder %s99, %s102
      %p108 = scmp.eq.s32.totalorder %s21, 0
      %p109 = por %p107, %p108
      %p110 = scmp.ne.s32.totalorder %s99, %s102
      %p111 = scmp.eq.s32.totalorder %s26, 1
      %p112 = por %p110, %p111
      %p113 = scmp.ne.s32.totalorder %s102, %s103
      %p114 = scmp.eq.s32.totalorder %s26, 0
      %p115 = por %p113, %p114
      %p116 = scmp.ne.s32.totalorder %s102, %s103
      %p117 = scmp.eq.s32.totalorder %s27, 1
      %p118 = por %p116, %p117
      %p120 = scmp.ne.s32.totalorder %s103, %s119
      %p121 = scmp.eq.s32.totalorder %s27, 0
      %p122 = por %p120, %p121
      %s123 = ssub.s32 %s21, %s28
      %p124 = scmp.eq.s32.totalorder %s123, 0
      %s126 = sadd.s32 %s125, 1
      %s127 = scalar_select %p124, %s125, %s126
      %p130 = pneg %p124
      %p131 = scmp.eq.s32.totalorder %s21, 1
      %p132 = por %p130, %p131
      %p133 = scmp.ne.s32.totalorder %s125, %s128
      %p134 = scmp.eq.s32.totalorder %s21, 0
      %p135 = por %p133, %p134
      %p136 = scmp.ne.s32.totalorder %s125, %s128
      %p137 = scmp.eq.s32.totalorder %s26, 1
      %p138 = por %p136, %p137
      %p139 = scmp.ne.s32.totalorder %s128, %s129
      %p140 = scmp.eq.s32.totalorder %s26, 0
      %p141 = por %p139, %p140
      %p142 = scmp.ne.s32.totalorder %s128, %s129
      %p143 = scmp.eq.s32.totalorder %s27, 1
      %p144 = por %p142, %p143
      %p146 = scmp.ne.s32.totalorder %s129, %s145
      %p147 = scmp.eq.s32.totalorder %s27, 0
      %p148 = por %p146, %p147
      %p149 = scmp.le.s32.totalorder 1, %s21
      %p150 = scmp.lt.s32.totalorder %s21, 3
      %p151 = pnand %p149, %p150
      %p152 = pneg %p151
      // Predicated region
      $region9: #{tpu_custom_call.1} parent=5 // pred_check
        _
      $region10: #{tpu_custom_call.1} parent=5 // pred_check_branch
        %154 = sbr.rel (%p151) target = $region12
      $region11: #{tpu_custom_call.1} parent=5 // pred_region
        %s155 = ssub.s32 %s21, 1
        // Predicated region
        $region13: #{tpu_custom_call.1} parent=11 // pred_check
          %p156 = pneg %p68
        $region14: #{tpu_custom_call.1} parent=11 // pred_check_branch
          %158 = sbr.rel (%p156) target = $region16
        $region15: #{tpu_custom_call.1} parent=11 // pred_region
          _
        $region16: #{tpu_custom_call.1} parent=11 // pred_fallthru
          _
        // Predicated region
        $region17: #{tpu_custom_call.1} parent=11 // pred_check
          %p159 = pneg %p89
        $region18: #{tpu_custom_call.1} parent=11 // pred_check_branch
          %161 = sbr.rel (%p159) target = $region20
        $region19: #{tpu_custom_call.1} parent=11 // pred_region
          %s163 = ssub.s32 2048, 2048
          %164 = vsyncadd [#allocation6], %s163
          %s165 = sshll.u32 [#allocation5], 4
          %s166 = int_to_ptr.vmem [resolvable:$true] %s165
          %171 = dma.hbm_to_vmem [thread:$0]  %s2, 2048, %s166, [#allocation6], 128, 128, 8
        $region20: #{tpu_custom_call.1} parent=11 // pred_fallthru
          _
      $region12: #{tpu_custom_call.1} parent=5 // pred_fallthru
        _
      %p172 = scmp.lt.s32.totalorder %s21, 2
      // Predicated region
      $region21: #{tpu_custom_call.1} parent=5 // pred_check
        %p173 = pneg %p172
      $region22: #{tpu_custom_call.1} parent=5 // pred_check_branch
        %175 = sbr.rel (%p173) target = $region24
      $region23: #{tpu_custom_call.1} parent=5 // pred_region
        // Predicated region
        $region25: #{tpu_custom_call.1} parent=23 // pred_check
          %p176 = pneg %p41
        $region26: #{tpu_custom_call.1} parent=23 // pred_check_branch
          %178 = sbr.rel (%p176) target = $region28
        $region27: #{tpu_custom_call.1} parent=23 // pred_region
          %s179 = sand.u32 %s31, 1
          %s180 = scalar_lea.sflag [#allocation3], %s179
          %s181 = sand.u32 %s31, 1
          %s182 = smul.addr %s181, 112
          %s183 = scalar_lea.vmem [#allocation2], %s182
          %s184 = smul.u32 14, %s21
          %s185 = ssub.s32 25, %s184
          %p186 = scmp.lt.s32.totalorder %s185, 14
          %s187 = scalar_select %p186, %s185, 14
          %s188 = smul.u32 128, %s187
          %s190 = ssub.s32 1792, %s188
          %191 = vsyncadd %s180, %s190
          %p192 = scmp.ne.s32.totalorder 0, %s188
          %s193 = smul.addr %s184, 128
          %s194 = scalar_lea.hbm %s0, %s193
          %s195 = smul.u32 8, %s187
          %s196 = sshll.u32 %s183, 4
          %s197 = int_to_ptr.vmem [resolvable:$true] %s196
          %s198 = sshll.u32 %s195, 4
          %202 = dma.hbm_to_vmem [thread:$0]  (%p192), %s194, %s198, %s197, %s180, 128, 128, 8
        $region28: #{tpu_custom_call.1} parent=23 // pred_fallthru
          _
      $region24: #{tpu_custom_call.1} parent=5 // pred_fallthru
        _
      %p203 = scmp.le.s32.totalorder 1, %s21
      %p204 = scmp.lt.s32.totalorder %s21, 3
      %p205 = pnand %p203, %p204
      %p206 = pneg %p205
      // Predicated region
      $region29: #{tpu_custom_call.1} parent=5 // pred_check
        _
      $region30: #{tpu_custom_call.1} parent=5 // pred_check_branch
        %208 = sbr.rel (%p205) target = $region32
      $region31: #{tpu_custom_call.1} parent=5 // pred_region
        %s209 = ssub.s32 %s21, 1
        %s210 = sand.u32 %s34, 1
        %s211 = scalar_lea.sflag [#allocation3], %s210
        %s212 = sand.u32 %s34, 1
        %s213 = smul.addr %s212, 112
        %s214 = scalar_lea.vmem [#allocation2], %s213
        // Predicated region
        $region33: #{tpu_custom_call.1} parent=31 // pred_check
          %p215 = pneg %p47
        $region34: #{tpu_custom_call.1} parent=31 // pred_check_branch
          %217 = sbr.rel (%p215) target = $region36
        $region35: #{tpu_custom_call.1} parent=31 // pred_region
          %218 = dma.done %s211, 1792
        $region36: #{tpu_custom_call.1} parent=31 // pred_fallthru
          _
        // Predicated region
        $region37: #{tpu_custom_call.1} parent=31 // pred_check
          %p219 = pneg %p89
        $region38: #{tpu_custom_call.1} parent=31 // pred_check_branch
          %221 = sbr.rel (%p219) target = $region40
        $region39: #{tpu_custom_call.1} parent=31 // pred_region
          %222 = dma.done [#allocation6], 2048
        $region40: #{tpu_custom_call.1} parent=31 // pred_fallthru
          _
        %s223 = sand.u32 %s34, 1
        %s224 = scalar_lea.sflag [#allocation3], %s223
        %s225 = sand.u32 %s34, 1
        %s226 = smul.addr %s225, 112
        %s227 = scalar_lea.vmem [#allocation2], %s226
        %p228 = pneg %p47
        %p229 = pneg %p44
        %p230 = pneg %p68
        %p231 = pneg %p65
        %p232 = pneg %p89
        %p233 = pneg %p86
        %p234 = pneg %p115
        %p235 = pneg %p112
        %s236 = sand.u32 %s102, 1
        %s237 = scalar_lea.sflag [#allocation4], %s236
        %s238 = sand.u32 %s102, 1
        %s239 = smul.addr %s238, 112
        %s240 = scalar_lea.vmem [#allocation7], %s239
        %p241 = pneg %p141
        %p242 = pneg %p138
        %s243 = sand.u32 %s128, 1
        %s244 = scalar_lea.sflag [#allocation9], %s243
        %s245 = sand.u32 %s128, 1
        %s246 = smul.addr %s245, 112
        %s247 = scalar_lea.vmem [#allocation8], %s246
        %s248 = smul.u32 14, %s26
        %s249 = ssub.s32 25, %s248
        %p250 = scmp.lt.s32.totalorder %s249, 14
        %s251 = scalar_select %p250, %s249, 14
        %s252 = smul.u32 128, %s251
        %s253 = smul.u32 14, %s26
        %s254 = ssub.s32 25, %s253
        %p255 = scmp.lt.s32.totalorder %s254, 14
        %s256 = scalar_select %p255, %s254, 14
        %s257 = smul.u32 128, %s256
        %s258 = smul.u32 14, %s26
        %s259 = ssub.s32 25, %s258
        %p260 = scmp.lt.s32.totalorder %s259, 14
        %s261 = scalar_select %p260, %s259, 14
        %s262 = smul.u32 128, %s261
        %v263 = vld [vmem:[%s214] sm:$0xff]
        %v264 = vld [vmem:[%s214 + $0x8] sm:$0xff]
        %v265 = vld [vmem:[%s214 + $0x10] sm:$0xff]
        %v266 = vld [vmem:[%s214 + $0x18] sm:$0xff]
        %v267 = vld [vmem:[%s214 + $0x20] sm:$0xff]
        %v268 = vld [vmem:[%s214 + $0x28] sm:$0xff]
        %v269 = vld [vmem:[%s214 + $0x30] sm:$0xff]
        %v270 = vld [vmem:[%s214 + $0x38] sm:$0xff]
        %v271 = vld [vmem:[%s214 + $0x40] sm:$0xff]
        %v272 = vld [vmem:[%s214 + $0x48] sm:$0xff]
        %v273 = vld [vmem:[%s214 + $0x50] sm:$0xff]
        %v274 = vld [vmem:[%s214 + $0x58] sm:$0xff]
        %v275 = vld [vmem:[%s214 + $0x60] sm:$0xff]
        %v276 = vld [vmem:[%s214 + $0x68] sm:$0xff]
        %v277 = vld [vmem:[%s1] sm:$0x1]
        %v278 = vmul.f32 %v263, 2.0
        %v279 = vmul.f32 %v264, 2.0
        %v280 = vmul.f32 %v265, 2.0
        %v281 = vmul.f32 %v266, 2.0
        %v282 = vmul.f32 %v267, 2.0
        %v283 = vmul.f32 %v268, 2.0
        %v284 = vmul.f32 %v269, 2.0
        %v285 = vmul.f32 %v270, 2.0
        %v286 = vmul.f32 %v271, 2.0
        %v287 = vmul.f32 %v272, 2.0
        %v288 = vmul.f32 %v273, 2.0
        %v289 = vmul.f32 %v274, 2.0
        %v290 = vmul.f32 %v275, 2.0
        %v291 = vmul.f32 %v276, 2.0
        %v292 = vsub.f32 %v278, 1.0
        %v293 = vsub.f32 %v279, 1.0
        %v294 = vsub.f32 %v280, 1.0
        %v295 = vsub.f32 %v281, 1.0
        %v296 = vsub.f32 %v282, 1.0
        %v297 = vsub.f32 %v283, 1.0
        %v298 = vsub.f32 %v284, 1.0
        %v299 = vsub.f32 %v285, 1.0
        %v300 = vsub.f32 %v286, 1.0
        %v301 = vsub.f32 %v287, 1.0
        %v302 = vsub.f32 %v288, 1.0
        %v303 = vsub.f32 %v289, 1.0
        %v304 = vsub.f32 %v290, 1.0
        %v305 = vsub.f32 %v291, 1.0
        %v306 = vmul.f32 %v292, 5.0
        %v307 = vmul.f32 %v293, 5.0
        %v308 = vmul.f32 %v294, 5.0
        %v309 = vmul.f32 %v295, 5.0
        %v310 = vmul.f32 %v296, 5.0
        %v311 = vmul.f32 %v297, 5.0
        %v312 = vmul.f32 %v298, 5.0
        %v313 = vmul.f32 %v299, 5.0
        %v314 = vmul.f32 %v300, 5.0
        %v315 = vmul.f32 %v301, 5.0
        %v316 = vmul.f32 %v302, 5.0
        %v317 = vmul.f32 %v303, 5.0
        %v318 = vmul.f32 %v304, 5.0
        %v319 = vmul.f32 %v305, 5.0
        %v321 = vlaneseq
        %v322 = vshrl.u32 %v321, 7
        %v323 = vsub.s32 0, %v322
        %v324 = vrot.slane %v277, %v323
        %v326 = vsub.f32 %v306, %v324
        %v327 = vsub.f32 %v307, %v324
        %v328 = vsub.f32 %v308, %v324
        %v329 = vsub.f32 %v309, %v324
        %v330 = vsub.f32 %v310, %v324
        %v331 = vsub.f32 %v311, %v324
        %v332 = vsub.f32 %v312, %v324
        %v333 = vsub.f32 %v313, %v324
        %v334 = vsub.f32 %v314, %v324
        %v335 = vsub.f32 %v315, %v324
        %v336 = vsub.f32 %v316, %v324
        %v337 = vsub.f32 %v317, %v324
        %v338 = vsub.f32 %v318, %v324
        %v339 = vsub.f32 %v319, %v324
        %v340 = vld [vmem:[#allocation5] sm:$0xff]
        %v341 = vld [vmem:[#allocation5 + $0x8] sm:$0xff]
        %v342 = vld [vmem:[#allocation5 + $0x10] sm:$0xff]
        %v343 = vld [vmem:[#allocation5 + $0x18] sm:$0xff]
        %v344 = vld [vmem:[#allocation5 + $0x20] sm:$0xff]
        %v345 = vld [vmem:[#allocation5 + $0x28] sm:$0xff]
        %v346 = vld [vmem:[#allocation5 + $0x30] sm:$0xff]
        %v347 = vld [vmem:[#allocation5 + $0x38] sm:$0xff]
        %v348 = vld [vmem:[#allocation5 + $0x40] sm:$0xff]
        %v349 = vld [vmem:[#allocation5 + $0x48] sm:$0xff]
        %v350 = vld [vmem:[#allocation5 + $0x50] sm:$0xff]
        %v351 = vld [vmem:[#allocation5 + $0x58] sm:$0xff]
        %v352 = vld [vmem:[#allocation5 + $0x60] sm:$0xff]
        %v353 = vld [vmem:[#allocation5 + $0x68] sm:$0xff]
        %v354 = vld [vmem:[#allocation5 + $0x70] sm:$0xff]
        %v355 = vld [vmem:[#allocation5 + $0x78] sm:$0xff]
        %356 = vmatprep.subr.mxu0 0.0
        %357 = vmatpush1.msra.mxu0 %v340
        %358 = vmatprep.subr.mxu0 0.0
        %359 = vmatpush1.msra.mxu0 %v341
        %360 = vmatprep.subr.mxu0 0.0
        %361 = vmatpush1.msra.mxu0 %v342
        %362 = vmatprep.subr.mxu0 0.0
        %363 = vmatpush1.msra.mxu0 %v343
        %364 = vmatprep.subr.mxu0 0.0
        %365 = vmatpush1.msra.mxu0 %v344
        %366 = vmatprep.subr.mxu0 0.0
        %367 = vmatpush1.msra.mxu0 %v345
        %368 = vmatprep.subr.mxu0 0.0
        %369 = vmatpush1.msra.mxu0 %v346
        %370 = vmatprep.subr.mxu0 0.0
        %371 = vmatpush1.msra.mxu0 %v347
        %372 = vmatprep.subr.mxu0 0.0
        %373 = vmatpush1.msra.mxu0 %v348
        %374 = vmatprep.subr.mxu0 0.0
        %375 = vmatpush1.msra.mxu0 %v349
        %376 = vmatprep.subr.mxu0 0.0
        %377 = vmatpush1.msra.mxu0 %v350
        %378 = vmatprep.subr.mxu0 0.0
        %379 = vmatpush1.msra.mxu0 %v351
        %380 = vmatprep.subr.mxu0 0.0
        %381 = vmatpush1.msra.mxu0 %v352
        %382 = vmatprep.subr.mxu0 0.0
        %383 = vmatpush1.msra.mxu0 %v353
        %384 = vmatprep.subr.mxu0 0.0
        %385 = vmatpush1.msra.mxu0 %v354
        %386 = vmatprep.subr.mxu0 0.0
        %387 = vmatpush1.msra.mxu0 %v355
        %388 = vmatprep.subr.mxu0 0.0
        %389 = vmatpush1.msra.mxu0 0.0
        %390 = vmatprep.subr.mxu0 0.0
        %391 = vmatpush1.msra.mxu0 0.0
        %392 = vmatprep.subr.mxu0 0.0
        %393 = vmatpush1.msra.mxu0 0.0
        %394 = vmatprep.subr.mxu0 0.0
        %395 = vmatpush1.msra.mxu0 0.0
        %396 = vmatprep.subr.mxu0 0.0
        %397 = vmatpush1.msra.mxu0 0.0
        %398 = vmatprep.subr.mxu0 0.0
        %399 = vmatpush1.msra.mxu0 0.0
        %400 = vmatprep.subr.mxu0 0.0
        %401 = vmatpush1.msra.mxu0 0.0
        %402 = vmatprep.subr.mxu0 0.0
        %403 = vmatpush1.msra.mxu0 0.0
        %404 = vmatprep.subr.mxu0 0.0
        %405 = vmatpush1.msra.mxu0 0.0
        %406 = vmatprep.subr.mxu0 0.0
        %407 = vmatpush1.msra.mxu0 0.0
        %408 = vmatprep.subr.mxu0 0.0
        %409 = vmatpush1.msra.mxu0 0.0
        %410 = vmatprep.subr.mxu0 0.0
        %411 = vmatpush1.msra.mxu0 0.0
        %412 = vmatprep.subr.mxu0 0.0
        %413 = vmatpush1.msra.mxu0 0.0
        %414 = vmatprep.subr.mxu0 0.0
        %415 = vmatpush1.msra.mxu0 0.0
        %416 = vmatprep.subr.mxu0 0.0
        %417 = vmatpush1.msra.mxu0 0.0
        %418 = vmatprep.subr.mxu0 0.0
        %419 = vmatpush1.msra.mxu0 0.0
        %420 = vmatprep.mubr.f32.mxu0 0.0
        %421 = vmatmul.mubr.f32.gmra.mrb[0].mxu0 %v326
        %v422 = vpop.f32.mrb[0].mxu0
        %v423 = vadd.f32 0.0, %v422
        %v424 = vpop.f32.mrb[0].mxu0
        %425 = vmatprep.mubr.f32.mxu0 0.0
        %426 = vmatmul.mubr.f32.gmra.mrb[0].mxu0 %v327
        %v427 = vpop.f32.mrb[0].mxu0
        %v428 = vadd.f32 0.0, %v427
        %v429 = vpop.f32.mrb[0].mxu0
        %430 = vmatprep.mubr.f32.mxu0 0.0
        %431 = vmatmul.mubr.f32.gmra.mrb[0].mxu0 %v328
        %v432 = vpop.f32.mrb[0].mxu0
        %v433 = vadd.f32 0.0, %v432
        %v434 = vpop.f32.mrb[0].mxu0
        %435 = vmatprep.mubr.f32.mxu0 0.0
        %436 = vmatmul.mubr.f32.gmra.mrb[0].mxu0 %v329
        %v437 = vpop.f32.mrb[0].mxu0
        %v438 = vadd.f32 0.0, %v437
        %v439 = vpop.f32.mrb[0].mxu0
        %440 = vmatprep.mubr.f32.mxu0 0.0
        %441 = vmatmul.mubr.f32.gmra.mrb[0].mxu0 %v330
        %v442 = vpop.f32.mrb[0].mxu0
        %v443 = vadd.f32 0.0, %v442
        %v444 = vpop.f32.mrb[0].mxu0
        %445 = vmatprep.mubr.f32.mxu0 0.0
        %446 = vmatmul.mubr.f32.gmra.mrb[0].mxu0 %v331
        %v447 = vpop.f32.mrb[0].mxu0
        %v448 = vadd.f32 0.0, %v447
        %v449 = vpop.f32.mrb[0].mxu0
        %450 = vmatprep.mubr.f32.mxu0 0.0
        %451 = vmatmul.mubr.f32.gmra.mrb[0].mxu0 %v332
        %v452 = vpop.f32.mrb[0].mxu0
        %v453 = vadd.f32 0.0, %v452
        %v454 = vpop.f32.mrb[0].mxu0
        %455 = vmatprep.mubr.f32.mxu0 0.0
        %456 = vmatmul.mubr.f32.gmra.mrb[0].mxu0 %v333
        %v457 = vpop.f32.mrb[0].mxu0
        %v458 = vadd.f32 0.0, %v457
        %v459 = vpop.f32.mrb[0].mxu0
        %460 = vmatprep.mubr.f32.mxu0 0.0
        %461 = vmatmul.mubr.f32.gmra.mrb[0].mxu0 %v334
        %v462 = vpop.f32.mrb[0].mxu0
        %v463 = vadd.f32 0.0, %v462
        %v464 = vpop.f32.mrb[0].mxu0
        %465 = vmatprep.mubr.f32.mxu0 0.0
        %466 = vmatmul.mubr.f32.gmra.mrb[0].mxu0 %v335
        %v467 = vpop.f32.mrb[0].mxu0
        %v468 = vadd.f32 0.0, %v467
        %v469 = vpop.f32.mrb[0].mxu0
        %470 = vmatprep.mubr.f32.mxu0 0.0
        %471 = vmatmul.mubr.f32.gmra.mrb[0].mxu0 %v336
        %v472 = vpop.f32.mrb[0].mxu0
        %v473 = vadd.f32 0.0, %v472
        %v474 = vpop.f32.mrb[0].mxu0
        %475 = vmatprep.mubr.f32.mxu0 0.0
        %476 = vmatmul.mubr.f32.gmra.mrb[0].mxu0 %v337
        %v477 = vpop.f32.mrb[0].mxu0
        %v478 = vadd.f32 0.0, %v477
        %v479 = vpop.f32.mrb[0].mxu0
        %480 = vmatprep.mubr.f32.mxu0 0.0
        %481 = vmatmul.mubr.f32.gmra.mrb[0].mxu0 %v338
        %v482 = vpop.f32.mrb[0].mxu0
        %v483 = vadd.f32 0.0, %v482
        %v484 = vpop.f32.mrb[0].mxu0
        %485 = vmatprep.mubr.f32.mxu0 0.0
        %486 = vmatmul.mubr.f32.gmra.mrb[0].mxu0 %v339
        %v487 = vpop.f32.mrb[0].mxu0
        %v488 = vadd.f32 0.0, %v487
        %v489 = vpop.f32.mrb[0].mxu0
        %490 = vdwg.mxu0
        %v491 = vadd.f32 %v324, %v423
        %v492 = vadd.f32 %v324, %v428
        %v493 = vadd.f32 %v324, %v433
        %v494 = vadd.f32 %v324, %v438
        %v495 = vadd.f32 %v324, %v443
        %v496 = vadd.f32 %v324, %v448
        %v497 = vadd.f32 %v324, %v453
        %v498 = vadd.f32 %v324, %v458
        %v499 = vadd.f32 %v324, %v463
        %v500 = vadd.f32 %v324, %v468
        %v501 = vadd.f32 %v324, %v473
        %v502 = vadd.f32 %v324, %v478
        %v503 = vadd.f32 %v324, %v483
        %v504 = vadd.f32 %v324, %v488
        %505 = vst [vmem:[%s247] sm:$0xff] %v491
        %506 = vst [vmem:[%s247 + $0x8] sm:$0xff] %v492
        %507 = vst [vmem:[%s247 + $0x10] sm:$0xff] %v493
        %508 = vst [vmem:[%s247 + $0x18] sm:$0xff] %v494
        %509 = vst [vmem:[%s247 + $0x20] sm:$0xff] %v495
        %510 = vst [vmem:[%s247 + $0x28] sm:$0xff] %v496
        %511 = vst [vmem:[%s247 + $0x30] sm:$0xff] %v497
        %512 = vst [vmem:[%s247 + $0x38] sm:$0xff] %v498
        %513 = vst [vmem:[%s247 + $0x40] sm:$0xff] %v499
        %514 = vst [vmem:[%s247 + $0x48] sm:$0xff] %v500
        %515 = vst [vmem:[%s247 + $0x50] sm:$0xff] %v501
        %516 = vst [vmem:[%s247 + $0x58] sm:$0xff] %v502
        %517 = vst [vmem:[%s247 + $0x60] sm:$0xff] %v503
        %518 = vst [vmem:[%s247 + $0x68] sm:$0xff] %v504
        %v519 = vmul.f32 %v491, 0.5
        %v520 = vmul.f32 %v492, 0.5
        %v521 = vmul.f32 %v493, 0.5
        %v522 = vmul.f32 %v494, 0.5
        %v523 = vmul.f32 %v495, 0.5
        %v524 = vmul.f32 %v496, 0.5
        %v525 = vmul.f32 %v497, 0.5
        %v526 = vmul.f32 %v498, 0.5
        %v527 = vmul.f32 %v499, 0.5
        %v528 = vmul.f32 %v500, 0.5
        %v529 = vmul.f32 %v501, 0.5
        %v530 = vmul.f32 %v502, 0.5
        %v531 = vmul.f32 %v503, 0.5
        %v532 = vmul.f32 %v504, 0.5
        %v533 = vtanh.pop %v519
        %v534 = vtanh.pop %v520
        %v535 = vtanh.pop %v521
        %v536 = vtanh.pop %v522
        %v537 = vtanh.pop %v523
        %v538 = vtanh.pop %v524
        %v539 = vtanh.pop %v525
        %v540 = vtanh.pop %v526
        %v541 = vtanh.pop %v527
        %v542 = vtanh.pop %v528
        %v543 = vtanh.pop %v529
        %v544 = vtanh.pop %v530
        %v545 = vtanh.pop %v531
        %v546 = vtanh.pop %v532
        %v547 = vadd.f32 %v533, 1.0
        %v548 = vadd.f32 %v534, 1.0
        %v549 = vadd.f32 %v535, 1.0
        %v550 = vadd.f32 %v536, 1.0
        %v551 = vadd.f32 %v537, 1.0
        %v552 = vadd.f32 %v538, 1.0
        %v553 = vadd.f32 %v539, 1.0
        %v554 = vadd.f32 %v540, 1.0
        %v555 = vadd.f32 %v541, 1.0
        %v556 = vadd.f32 %v542, 1.0
        %v557 = vadd.f32 %v543, 1.0
        %v558 = vadd.f32 %v544, 1.0
        %v559 = vadd.f32 %v545, 1.0
        %v560 = vadd.f32 %v546, 1.0
        %v561 = vmul.f32 %v547, 0.5
        %v562 = vmul.f32 %v548, 0.5
        %v563 = vmul.f32 %v549, 0.5
        %v564 = vmul.f32 %v550, 0.5
        %v565 = vmul.f32 %v551, 0.5
        %v566 = vmul.f32 %v552, 0.5
        %v567 = vmul.f32 %v553, 0.5
        %v568 = vmul.f32 %v554, 0.5
        %v569 = vmul.f32 %v555, 0.5
        %v570 = vmul.f32 %v556, 0.5
        %v571 = vmul.f32 %v557, 0.5
        %v572 = vmul.f32 %v558, 0.5
        %v573 = vmul.f32 %v559, 0.5
        %v574 = vmul.f32 %v560, 0.5
        %575 = vst [vmem:[%s240] sm:$0xff] %v561
        %576 = vst [vmem:[%s240 + $0x8] sm:$0xff] %v562
        %577 = vst [vmem:[%s240 + $0x10] sm:$0xff] %v563
        %578 = vst [vmem:[%s240 + $0x18] sm:$0xff] %v564
        %579 = vst [vmem:[%s240 + $0x20] sm:$0xff] %v565
        %580 = vst [vmem:[%s240 + $0x28] sm:$0xff] %v566
        %581 = vst [vmem:[%s240 + $0x30] sm:$0xff] %v567
        %582 = vst [vmem:[%s240 + $0x38] sm:$0xff] %v568
        %583 = vst [vmem:[%s240 + $0x40] sm:$0xff] %v569
        %584 = vst [vmem:[%s240 + $0x48] sm:$0xff] %v570
        %585 = vst [vmem:[%s240 + $0x50] sm:$0xff] %v571
        %586 = vst [vmem:[%s240 + $0x58] sm:$0xff] %v572
        %587 = vst [vmem:[%s240 + $0x60] sm:$0xff] %v573
        %588 = vst [vmem:[%s240 + $0x68] sm:$0xff] %v574
        %s589 = sand.u32 %s102, 1
        %s590 = scalar_lea.sflag [#allocation4], %s589
        %s591 = sand.u32 %s102, 1
        %s592 = smul.addr %s591, 112
        %s593 = scalar_lea.vmem [#allocation7], %s592
        %s594 = sand.u32 %s128, 1
        %s595 = scalar_lea.sflag [#allocation9], %s594
        %s596 = sand.u32 %s128, 1
        %s597 = smul.addr %s596, 112
        %s598 = scalar_lea.vmem [#allocation8], %s597
        // Predicated region
        $region41: #{tpu_custom_call.1} parent=31 // pred_check
          %p599 = pneg %p112
        $region42: #{tpu_custom_call.1} parent=31 // pred_check_branch
          %601 = sbr.rel (%p599) target = $region44
        $region43: #{tpu_custom_call.1} parent=31 // pred_region
          %s602 = smul.u32 14, %s26
          %s603 = ssub.s32 25, %s602
          %p604 = scmp.lt.s32.totalorder %s603, 14
          %s605 = scalar_select %p604, %s603, 14
          %s606 = smul.u32 128, %s605
          %s608 = ssub.s32 1792, %s606
          %609 = vsyncadd %s590, %s608
          %p610 = scmp.ne.s32.totalorder 0, %s606
          %s611 = smul.addr %s602, 128
          %s612 = scalar_lea.hbm %s3, %s611
          %s613 = smul.u32 8, %s605
          %s614 = sshll.u32 %s593, 4
          %s615 = int_to_ptr.vmem [resolvable:$true] %s614
          %s616 = sshll.u32 %s613, 4
          %620 = dma.vmem_to_hbm [thread:$0]  (%p610), %s615, %s616, %s612, %s590, 128, 128, 8
        $region44: #{tpu_custom_call.1} parent=31 // pred_fallthru
          _
        // Predicated region
        $region45: #{tpu_custom_call.1} parent=31 // pred_check
          %p621 = pneg %p138
        $region46: #{tpu_custom_call.1} parent=31 // pred_check_branch
          %623 = sbr.rel (%p621) target = $region48
        $region47: #{tpu_custom_call.1} parent=31 // pred_region
          %s624 = smul.u32 14, %s26
          %s625 = ssub.s32 25, %s624
          %p626 = scmp.lt.s32.totalorder %s625, 14
          %s627 = scalar_select %p626, %s625, 14
          %s628 = smul.u32 128, %s627
          %s630 = ssub.s32 1792, %s628
          %631 = vsyncadd %s595, %s630
          %p632 = scmp.ne.s32.totalorder 0, %s628
          %s633 = smul.addr %s624, 128
          %s634 = scalar_lea.hbm %s4, %s633
          %s635 = smul.u32 8, %s627
          %s636 = sshll.u32 %s598, 4
          %s637 = int_to_ptr.vmem [resolvable:$true] %s636
          %s638 = sshll.u32 %s635, 4
          %642 = dma.vmem_to_hbm [thread:$0]  (%p632), %s637, %s638, %s634, %s595, 128, 128, 8
        $region48: #{tpu_custom_call.1} parent=31 // pred_fallthru
          _
      $region32: #{tpu_custom_call.1} parent=5 // pred_fallthru
        _
      %p643 = scmp.le.s32.totalorder 2, %s21
      // Predicated region
      $region49: #{tpu_custom_call.1} parent=5 // pred_check
        %p644 = pneg %p643
      $region50: #{tpu_custom_call.1} parent=5 // pred_check_branch
        %646 = sbr.rel (%p644) target = $region52
      $region51: #{tpu_custom_call.1} parent=5 // pred_region
        %s647 = ssub.s32 %s21, 2
        // Predicated region
        $region53: #{tpu_custom_call.1} parent=51 // pred_check
          %p648 = pneg %p118
        $region54: #{tpu_custom_call.1} parent=51 // pred_check_branch
          %650 = sbr.rel (%p648) target = $region56
        $region55: #{tpu_custom_call.1} parent=51 // pred_region
          %s651 = sand.u32 %s103, 1
          %s652 = scalar_lea.sflag [#allocation4], %s651
          %s653 = sand.u32 %s103, 1
          %s654 = smul.addr %s653, 112
          %s655 = scalar_lea.vmem [#allocation7], %s654
          %656 = dma.done %s652, 1792
        $region56: #{tpu_custom_call.1} parent=51 // pred_fallthru
          _
        // Predicated region
        $region57: #{tpu_custom_call.1} parent=51 // pred_check
          %p657 = pneg %p144
        $region58: #{tpu_custom_call.1} parent=51 // pred_check_branch
          %659 = sbr.rel (%p657) target = $region60
        $region59: #{tpu_custom_call.1} parent=51 // pred_region
          %s660 = sand.u32 %s129, 1
          %s661 = scalar_lea.sflag [#allocation9], %s660
          %s662 = sand.u32 %s129, 1
          %s663 = smul.addr %s662, 112
          %s664 = scalar_lea.vmem [#allocation8], %s663
          %665 = dma.done %s661, 1792
        $region60: #{tpu_custom_call.1} parent=51 // pred_fallthru
          _
      $region52: #{tpu_custom_call.1} parent=5 // pred_fallthru
        _
    $region6: #{tpu_custom_call.1} parent=1 // loop_footer
      %s25 = sadd.s32 1, %s21
    $region7: #{tpu_custom_call.1} parent=1 // loop_footer_branch
      %20 = sbr.rel target = $region3
    $region8: #{tpu_custom_call.1} parent=1 // loop_exit
      _
    %666 = vsyncpa [#allocation3], 1
    %s667 = scalar_lea.sflag [#allocation3], 1
    %668 = vsyncpa %s667, 1
    %669 = vsyncpa [#allocation6], 1
    %670 = vsyncpa [#allocation4], 1
    %s671 = scalar_lea.sflag [#allocation4], 1
    %672 = vsyncpa %s671, 1
    %673 = vsyncpa [#allocation9], 1
    %s674 = scalar_lea.sflag [#allocation9], 1
    %675 = vsyncpa %s674, 1

</llo_original>
